<compile_context>
chip_gen: v7x
topology: tpu7x:2x2x1
jax: 0.10.0
libtpu: 0.0.40
codegen_flags: <defaults>
</compile_context>

<pallas_src>
import jax
import jax.numpy as jnp
from jax import lax
from jax.experimental import pallas as pl
from jax.experimental.pallas import tpu as pltpu


# ----------------------------------------------------------------------------
# Kernel: one (TM, B) similarity tile per grid step.
# ----------------------------------------------------------------------------
def _isogclr_sim_kernel(zis_ref, zjst_ref, imgv_ref, txtv_ref,
                        img_out_ref, txt_out_ref,
                        m_ref, se_ref, ws_ref):
    f32 = jnp.float32
    i = pl.program_id(1)
    tm = zis_ref.shape[0]
    B = zjst_ref.shape[1]

    @pl.when(i == 0)
    def _init():
        # torch's masked diagonal contributes an exact 0 to every column max,
        # so starting the running max at 0 is always valid (new_b_T >= 0).
        m_ref[...] = jnp.zeros_like(m_ref)
        se_ref[...] = jnp.zeros_like(se_ref)
        ws_ref[...] = jnp.zeros_like(ws_ref)

    # (TM, B) similarity tile on the MXU: bf16 inputs, f32 accumulation.
    sim = jnp.dot(zis_ref[...], zjst_ref[...], preferred_element_type=f32)

    imgv = imgv_ref[...]                       # (TM, 2): [1/tau_I, diag]
    inv_tau_I = imgv[:, 0:1]
    diag_col = imgv[:, 1:2]
    inv_tau_T = txtv_ref[0:1, :]               # (1, B)
    diag_row = txtv_ref[1:2, :]                # (1, B)

    # Negatives mask: one lane iota vs. a (TM, 1) column of global row ids.
    row0 = (pl.program_id(0) * pl.num_programs(1) + i) * tm
    col_ids = lax.broadcasted_iota(jnp.int32, (tm, B), 1)
    row_ids = lax.broadcasted_iota(jnp.int32, (tm, 1), 0) + row0
    is_neg = col_ids != row_ids                # broadcast along lanes

    # ----- image (row) direction: local partials, finalized in the wrapper ---
    image_diffs = sim - diag_col
    img_dt = image_diffs * inv_tau_I
    row_max = jnp.max(img_dt, axis=1, keepdims=True)          # local shift
    exp_img = jnp.where(is_neg, jnp.exp(img_dt - row_max), 0.0)
    img_out_ref[:, 0:1] = row_max
    img_out_ref[:, 1:2] = jnp.sum(exp_img, axis=1, keepdims=True)
    img_out_ref[:, 2:3] = jnp.sum(exp_img * image_diffs, axis=1, keepdims=True)
    # TODO(synk): image partials are stored as a (TM, 3) slab (3-wide masked
    # stores); a lane-dense (3, B) layout would need small in-kernel transposes.

    # ----- text (column) direction: online accumulation across row tiles -----
    text_diffs = sim - diag_row
    txt_dt = text_diffs * inv_tau_T
    m_prev = m_ref[...]
    m_new = jnp.maximum(jnp.max(txt_dt, axis=0, keepdims=True), m_prev)
    rescale = jnp.exp(m_prev - m_new)
    exp_txt = jnp.where(is_neg, jnp.exp(txt_dt - m_new), 0.0)
    se_ref[...] = se_ref[...] * rescale + jnp.sum(exp_txt, axis=0, keepdims=True)
    ws_ref[...] = ws_ref[...] * rescale + jnp.sum(exp_txt * text_diffs,
                                                  axis=0, keepdims=True)
    m_ref[...] = m_new

    # Emit this core-slice's partial (max / exp-sum / weighted-sum) once.
    @pl.when(i == pl.num_programs(1) - 1)
    def _finalize():
        txt_out_ref[0:1, :] = m_ref[...]
        txt_out_ref[1:2, :] = se_ref[...]
        txt_out_ref[2:3, :] = ws_ref[...]


# ----------------------------------------------------------------------------
# Generation-aware tiling helpers.
# ----------------------------------------------------------------------------
def _vmem_capacity_bytes():
    try:
        return int(pltpu.get_tpu_info().vmem_capacity_bytes)
    except Exception:
        return 64 * 1024 * 1024          # conservative (v7x-sized) fallback


def _pick_row_tile(B, D, vmem_bytes, max_tile=None):
    """Largest row tile TM (divisor of B) whose working set fits ~70% of VMEM.

    Budget: resident (D,B) bf16 RHS (double-buffered), double-buffered (TM,D)
    bf16 LHS tile, ~7 live (TM,B) f32 temporaries, small O(B) slabs."""
    budget = int(vmem_bytes * 0.7)
    fixed = 4 * B * D + 64 * B + (2 << 20)
    cands = [t for t in (512, 256, 128, 64, 32, 16, 8) if t <= B]
    if max_tile is not None:
        cands = [t for t in cands if t <= max_tile]
    fallback = None
    for t in cands:
        if B % t == 0:
            if fallback is None:
                fallback = t
            if fixed + 4 * t * D + 28 * t * B <= budget:
                return t
    if fallback is not None:
        return fallback
    # TODO(synk): odd batch sizes fall back to a single full-B tile; pad B in
    # the caller if that exceeds the VMEM budget.
    return B


# ----------------------------------------------------------------------------
# Wrapper: functional equivalent of Group_iSogCLR_Loss.forward.
# ----------------------------------------------------------------------------
def group_isogclr_forward(params, state, zis, zjs, ids, norm=True, max_tile=None):
    """Returns (total_loss, p_I, p_T, new_state)."""
    B, D = zis.shape
    f32 = jnp.float32
    gamma = params["gamma"]
    eps = params["eps"]
    G = params["num_groups"]

    # ---- feature prep (moved out of the kernel) ----
    zis32 = zis.astype(f32)
    zjs32 = zjs.astype(f32)
    if norm:
        # F.normalize(p=2, dim=1, eps=1e-12) == x * rsqrt(max(|x|^2, 1e-24))
        zis32 = zis32 * lax.rsqrt(jnp.maximum(
            jnp.sum(zis32 * zis32, axis=1, keepdims=True), 1e-24))
        zjs32 = zjs32 * lax.rsqrt(jnp.maximum(
            jnp.sum(zjs32 * zjs32, axis=1, keepdims=True), 1e-24))
    zis_bf = zis32.astype(jnp.bfloat16)
    zjs_bf = zjs32.astype(jnp.bfloat16)
    # Diagonal computed from the same bf16-cast features feeding the MXU.
    diag = jnp.sum(zis_bf.astype(f32) * zjs_bf.astype(f32), axis=1)     # (B,)

    # Zero-pad K to a multiple of 128 (clean MXU feed, esp. v5e).
    Dp = ((D + 127) // 128) * 128
    if Dp != D:
        pad = ((0, 0), (0, Dp - D))
        zis_bf = jnp.pad(zis_bf, pad)
        zjs_bf = jnp.pad(zjs_bf, pad)
    zjs_t = zjs_bf.T                                                     # (Dp, B)

    tau_I_b = params["taus_I"][ids].astype(f32)
    tau_T_b = params["taus_T"][ids].astype(f32)
    img_vec = jnp.stack([1.0 / tau_I_b, diag], axis=1)                   # (B, 2)
    txt_vec = jnp.stack([1.0 / tau_T_b, diag], axis=0)                   # (2, B)

    cap = _vmem_capacity_bytes()
    TM = _pick_row_tile(B, Dp, cap, max_tile=max_tile)
    NT = max(B // TM, 1)
    # Split row tiles across two TensorCores when possible (v7x megacore);
    # harmless loop split on single-core chips.
    NC = 2 if (NT >= 2 and NT % 2 == 0) else 1
    NTC = NT // NC
    vmem_limit = max(int(cap * 0.9), 32 * 1024 * 1024)

    img_out, txt_out = pl.pallas_call(
        _isogclr_sim_kernel,
        grid=(NC, NTC),
        in_specs=[
            pl.BlockSpec((TM, Dp), lambda c, i: (c * NTC + i, 0)),   # zis row tile
            pl.BlockSpec((Dp, B), lambda c, i: (0, 0)),              # zjs^T resident
            pl.BlockSpec((TM, 2), lambda c, i: (c * NTC + i, 0)),    # [1/tau_I, diag]
            pl.BlockSpec((2, B), lambda c, i: (0, 0)),               # [1/tau_T; diag]
        ],
        out_specs=[
            pl.BlockSpec((TM, 3), lambda c, i: (c * NTC + i, 0)),    # image partials
            pl.BlockSpec((None, 3, B), lambda c, i: (c, 0, 0)),      # per-core text partials
        ],
        out_shape=(
            jax.ShapeDtypeStruct((B, 3), f32),
            jax.ShapeDtypeStruct((NC, 3, B), f32),
        ),
        scratch_shapes=[
            pltpu.VMEM((1, B), f32),    # running column max
            pltpu.VMEM((1, B), f32),    # running column exp-sum
            pltpu.VMEM((1, B), f32),    # running column weighted sum
        ],
        compiler_params=pltpu.CompilerParams(
            dimension_semantics=("parallel", "arbitrary"),
            vmem_limit_bytes=vmem_limit),
    )(zis_bf, zjs_t, img_vec, txt_vec)

    # ---- gather old per-sample state / group weights (plain JAX, O(B)) ----
    old_bI = state["b_I"][ids].astype(f32)
    old_bT = state["b_T"][ids].astype(f32)
    old_sI = state["s_I"][ids].astype(f32)
    old_sT = state["s_T"][ids].astype(f32)
    gid_I = params["group_info_I"][ids]
    gid_T = params["group_info_T"][ids]
    gw_I = (G * state["p_I"][gid_I]).astype(f32)
    gw_T = (G * state["p_T"][gid_T]).astype(f32)

    # ---- image (row) direction: exact rescale of local-shift partials ----
    row_max = img_out[:, 0]
    g_loc = img_out[:, 1]
    w_loc = img_out[:, 2]
    new_bI = jnp.maximum(jnp.maximum(row_max, old_bI), 0.0)  # diag gives exact 0 in torch
    scale_I = jnp.exp(row_max - new_bI)
    g_I = g_loc * scale_I
    new_sI = (1.0 - gamma) * old_sI * jnp.exp(old_bI - new_bI) + gamma * g_I
    img_loss = gw_I * (w_loc * scale_I) / jnp.maximum(new_sI, eps)

    # ---- text (column) direction: log-sum-exp merge of per-core partials ----
    m_c = txt_out[:, 0, :]                                    # (NC, B), m_c >= 0
    se_c = txt_out[:, 1, :]
    ws_c = txt_out[:, 2, :]
    new_bT = jnp.maximum(jnp.max(m_c, axis=0), old_bT)
    scale_T = jnp.exp(m_c - new_bT[None, :])
    g_T = jnp.sum(se_c * scale_T, axis=0)
    new_sT = (1.0 - gamma) * old_sT * jnp.exp(old_bT - new_bT) + gamma * g_T
    txt_loss = gw_T * jnp.sum(ws_c * scale_T, axis=0) / jnp.maximum(new_sT, eps)

    # ---- state scatter (self.b_I[ids], self.s_I[ids], ...) ----
    b_I = state["b_I"].at[ids].set(new_bI)
    b_T = state["b_T"].at[ids].set(new_bT)
    s_I_state = state["s_I"].at[ids].set(new_sI)   # stored UNCLAMPED, as in torch
    s_T_state = state["s_T"].at[ids].set(new_sT)

    alpha = params["alpha_weight"]
    total_loss = alpha * jnp.mean(img_loss) + (1.0 - alpha) * jnp.mean(txt_loss)

    # ---- group / p updates (plain JAX glue, O(B)+O(G)) ----
    sI_c = jnp.maximum(new_sI, eps)
    sT_c = jnp.maximum(new_sT, eps)
    # TODO(synk): the torch code's `log(s_I) + self.b_I[ids]` broadcasts
    # [B,1]+[B] -> [B,B] (and index_to_groupid references an undefined
    # `tensor`); we use the intended per-sample F_I / F_T of shape [B].
    F_I = tau_I_b * (jnp.log(sI_c) + new_bI + params["rho"])
    F_T = tau_T_b * (jnp.log(sT_c) + new_bT + params["rho"])

    onehot_I = jax.nn.one_hot(gid_I, G, dtype=f32)
    onehot_T = jax.nn.one_hot(gid_T, G, dtype=f32)
    counts_I = jnp.sum(onehot_I, axis=0)
    counts_T = jnp.sum(onehot_T, axis=0)
    # Safe divide: empty groups contribute zero (torch would produce inf/NaN).
    grad_p_I = jnp.where(counts_I > 0,
                         jnp.sum(onehot_I * F_I[:, None], axis=0)
                         / jnp.maximum(counts_I, 1.0), 0.0)
    grad_p_T = jnp.where(counts_T > 0,
                         jnp.sum(onehot_T * F_T[:, None], axis=0)
                         / jnp.maximum(counts_T, 1.0), 0.0)

    z_I = (1.0 - gamma) * state["z_I"] + gamma * grad_p_I
    z_T = (1.0 - gamma) * state["z_T"] + gamma * grad_p_T

    lam = params["lambada"]
    eta_p = params["eta_p"]
    clip = params["grad_clip"]
    # TODO(synk): no floor on p after renormalization (matches torch); p entries
    # can collapse toward 0 over many steps.
    grad_hp_I = -lam * jnp.log(state["p_I"] + eps) - lam
    grad_hp_T = -lam * jnp.log(state["p_T"] + eps) - lam
    new_p_I = state["p_I"] * jnp.exp(2.0 * eta_p * jnp.clip(z_I + grad_hp_I, -clip, clip))
    new_p_T = state["p_T"] * jnp.exp(2.0 * eta_p * jnp.clip(z_T + grad_hp_T, -clip, clip))
    p_I = new_p_I / jnp.sum(new_p_I)
    p_T = new_p_T / jnp.sum(new_p_T)

    new_state = dict(s_I=s_I_state, s_T=s_T_state, b_I=b_I, b_T=b_T,
                     z_I=z_I, z_T=z_T, p_I=p_I, p_T=p_T)
    return total_loss, p_I, p_T, new_state


if __name__ == "__main__":
    B = 256        # batch_size
    D = 64         # feature_dim (padded to 128 inside the wrapper)
    N = 1024       # size of per-sample running stats (synthetic, small)
    G = 8          # num_groups

    key = jax.random.PRNGKey(0)
    k1, k2, k3, k4 = jax.random.split(key, 4)

    zis = jax.random.normal(k1, (B, D), dtype=jnp.float32)
    zjs = jax.random.normal(k2, (B, D), dtype=jnp.float32)
    ids = (jnp.arange(B, dtype=jnp.int32) * 5) % N      # unique per-batch indices

    params = dict(
        alpha_weight=0.5,
        rho=6.0,
        lambada=1.0,
        num_groups=G,
        gamma=0.8,
        eta_p=0.01,
        eps=1e-14,
        grad_clip=5.0,
        taus_I=jax.random.uniform(k3, (N,), minval=0.05, maxval=0.15,
                                  dtype=jnp.float32),
        taus_T=jax.random.uniform(k4, (N,), minval=0.05, maxval=0.15,
                                  dtype=jnp.float32),
        group_info_I=jnp.arange(N, dtype=jnp.int32) % G,
        group_info_T=(jnp.arange(N, dtype=jnp.int32) + 1) % G,
    )
    state = dict(
        s_I=jnp.zeros((N,), jnp.float32),
        s_T=jnp.zeros((N,), jnp.float32),
        b_I=jnp.zeros((N,), jnp.float32),
        b_T=jnp.zeros((N,), jnp.float32),
        z_I=jnp.zeros((G,), jnp.float32),
        z_T=jnp.zeros((G,), jnp.float32),
        p_I=jnp.ones((G,), jnp.float32) / G,
        p_T=jnp.ones((G,), jnp.float32) / G,
    )

    # max_tile=64 -> TM=64, 4 row tiles, 2-way "core" split -> grid (2, 2):
    # exercises the tiled LHS, the online text accumulators and the per-core
    # partial merge even at this small demo size.
    total_loss, p_I, p_T, state = group_isogclr_forward(
        params, state, zis, zjs, ids, max_tile=64)
    # second call exercises the running-state path (b/s nonzero, updated p)
    total_loss, p_I, p_T, state = group_isogclr_forward(
        params, state, zis, zjs, ids, max_tile=64)

    jax.block_until_ready((total_loss, p_I, p_T))
    assert bool(jnp.isfinite(total_loss)), "non-finite loss"
    assert bool(jnp.all(jnp.isfinite(p_I))) and bool(jnp.all(jnp.isfinite(p_T)))
    print("KERNEL_OK")
</pallas_src>

<mosaic_0001>
module attributes {stable_mosaic.version = 11 : i64} {
  func.func @_isogclr_sim_kernel(%arg0: i32, %arg1: i32, %arg2: memref<64x128xbf16, #tpu.memory_space<vmem>>, %arg3: memref<128x256xbf16, #tpu.memory_space<vmem>>, %arg4: memref<64x2xf32, #tpu.memory_space<vmem>>, %arg5: memref<2x256xf32, #tpu.memory_space<vmem>>, %arg6: memref<64x3xf32, #tpu.memory_space<vmem>>, %arg7: memref<1x3x256xf32, #tpu.memory_space<vmem>>, %arg8: memref<1x256xf32, #tpu.memory_space<vmem>>, %arg9: memref<1x256xf32, #tpu.memory_space<vmem>>, %arg10: memref<1x256xf32, #tpu.memory_space<vmem>>) attributes {dimension_semantics = [#tpu.dimension_semantics<parallel>, #tpu.dimension_semantics<arbitrary>], iteration_bounds = array<i64: 2, 2>, scalar_prefetch = 0 : i64, scratch_operands = 3 : i64, tpu.core_type = #tpu.core_type<tc>, window_params = [{transform_indices = @transform_0, window_bounds = array<i64: 64, 128>}, {pipeline_mode = #tpu.pipeline_mode<synchronous>, transform_indices = @transform_1, window_bounds = array<i64: 128, 256>}, {transform_indices = @transform_2, window_bounds = array<i64: 64, 2>}, {pipeline_mode = #tpu.pipeline_mode<synchronous>, transform_indices = @transform_3, window_bounds = array<i64: 2, 256>}, {transform_indices = @transform_4, window_bounds = array<i64: 64, 3>}, {transform_indices = @transform_5, window_bounds = array<i64: 1, 3, 256>}]} {
    %c0_i32 = arith.constant 0 : i32
    %0 = arith.cmpi eq, %arg1, %c0_i32 : i32
    %1 = arith.extui %0 : i1 to i32
    %c0_i32_0 = arith.constant 0 : i32
    %2 = arith.cmpi ne, %1, %c0_i32_0 : i32
    scf.if %2 {
      %cst_35 = arith.constant 0.000000e+00 : f32
      %71 = vector.broadcast %cst_35 : f32 to vector<1x256xf32>
      %c0_36 = arith.constant 0 : index
      %c0_37 = arith.constant 0 : index
      %72 = vector.load %arg8[%c0_36, %c0_37] : memref<1x256xf32, #tpu.memory_space<vmem>>, vector<1x256xf32>
      tpu.vector_store %arg8[%c0_36, %c0_37], %71 {strides = array<i32>} : memref<1x256xf32, #tpu.memory_space<vmem>>, vector<1x256xf32>,
      %cst_38 = arith.constant 0.000000e+00 : f32
      %73 = vector.broadcast %cst_38 : f32 to vector<1x256xf32>
      %c0_39 = arith.constant 0 : index
      %c0_40 = arith.constant 0 : index
      %74 = vector.load %arg9[%c0_39, %c0_40] : memref<1x256xf32, #tpu.memory_space<vmem>>, vector<1x256xf32>
      tpu.vector_store %arg9[%c0_39, %c0_40], %73 {strides = array<i32>} : memref<1x256xf32, #tpu.memory_space<vmem>>, vector<1x256xf32>,
      %cst_41 = arith.constant 0.000000e+00 : f32
      %75 = vector.broadcast %cst_41 : f32 to vector<1x256xf32>
      %c0_42 = arith.constant 0 : index
      %c0_43 = arith.constant 0 : index
      %76 = vector.load %arg10[%c0_42, %c0_43] : memref<1x256xf32, #tpu.memory_space<vmem>>, vector<1x256xf32>
      tpu.vector_store %arg10[%c0_42, %c0_43], %75 {strides = array<i32>} : memref<1x256xf32, #tpu.memory_space<vmem>>, vector<1x256xf32>,
    } else {
    }
    %c0 = arith.constant 0 : index
    %c0_1 = arith.constant 0 : index
    %3 = vector.load %arg2[%c0, %c0_1] : memref<64x128xbf16, #tpu.memory_space<vmem>>, vector<64x128xbf16>
    %c0_2 = arith.constant 0 : index
    %c0_3 = arith.constant 0 : index
    %4 = vector.load %arg3[%c0_2, %c0_3] : memref<128x256xbf16, #tpu.memory_space<vmem>>, vector<128x256xbf16>
    %cst = arith.constant dense<0.000000e+00> : vector<64x256xf32>
    %5 = tpu.matmul %3, %4, %cst {dimension_numbers = #tpu.dot_dimension_numbers<[1], [0], [0], [1], [0, 0, 1, 1], [], []>} : vector<64x128xbf16>, vector<128x256xbf16>, vector<64x256xf32> -> vector<64x256xf32>
    %c0_4 = arith.constant 0 : index
    %c0_5 = arith.constant 0 : index
    %6 = vector.load %arg4[%c0_4, %c0_5] : memref<64x2xf32, #tpu.memory_space<vmem>>, vector<64x2xf32>
    %7 = vector.extract_strided_slice %6 {offsets = [0, 0], sizes = [64, 1], strides = [1, 1]} : vector<64x2xf32> to vector<64x1xf32>
    %8 = vector.extract_strided_slice %6 {offsets = [0, 1], sizes = [64, 1], strides = [1, 1]} : vector<64x2xf32> to vector<64x1xf32>
    %c0_6 = arith.constant 0 : index
    %c0_7 = arith.constant 0 : index
    %9 = vector.load %arg5[%c0_6, %c0_7] : memref<2x256xf32, #tpu.memory_space<vmem>>, vector<1x256xf32>
    %c1 = arith.constant 1 : index
    %c0_8 = arith.constant 0 : index
    %10 = vector.load %arg5[%c1, %c0_8] : memref<2x256xf32, #tpu.memory_space<vmem>>, vector<1x256xf32>
    %c2_i32 = arith.constant 2 : i32
    %11 = arith.muli %arg0, %c2_i32 : i32
    %12 = arith.addi %11, %arg1 : i32
    %c64_i32 = arith.constant 64 : i32
    %13 = arith.muli %12, %c64_i32 : i32
    %14 = tpu.iota {dimensions = array<i32: 1>} : vector<64x256xi32>
    %15 = tpu.iota {dimensions = array<i32: 0>} : vector<64x1xi32>
    %16 = vector.broadcast %13 : i32 to vector<64x1xi32>
    %17 = arith.addi %15, %16 : vector<64x1xi32>
    %18 = vector.broadcast %17 : vector<64x1xi32> to vector<64x256xi32>
    %19 = arith.cmpi ne, %14, %18 : vector<64x256xi32>
    %20 = vector.broadcast %8 : vector<64x1xf32> to vector<64x256xf32>
    %21 = arith.subf %5, %20 : vector<64x256xf32>
    %22 = vector.broadcast %7 : vector<64x1xf32> to vector<64x256xf32>
    %23 = arith.mulf %21, %22 : vector<64x256xf32>
    %cst_9 = arith.constant dense<0xFF800000> : vector<64xf32>
    %24 = vector.multi_reduction <maximumf>, %23, %cst_9 [1] : vector<64x256xf32> to vector<64xf32>
    %25 = vector.shape_cast %24 : vector<64xf32> to vector<64x1xf32>
    %26 = vector.broadcast %25 : vector<64x1xf32> to vector<64x256xf32>
    %27 = arith.subf %23, %26 : vector<64x256xf32>
    %28 = math.exp %27 : vector<64x256xf32>
    %cst_10 = arith.constant 0.000000e+00 : f32
    %29 = vector.broadcast %cst_10 : f32 to vector<64x256xf32>
    %30 = arith.select %19, %28, %29 : vector<64x256xi1>, vector<64x256xf32>
    %c0_11 = arith.constant 0 : index
    %c0_12 = arith.constant 0 : index
    %31 = vector.load %arg6[%c0_11, %c0_12] : memref<64x3xf32, #tpu.memory_space<vmem>>, vector<64x1xf32>
    tpu.vector_store %arg6[%c0_11, %c0_12], %25 {strides = array<i32>} : memref<64x3xf32, #tpu.memory_space<vmem>>, vector<64x1xf32>,
    %cst_13 = arith.constant dense<0.000000e+00> : vector<64xf32>
    %32 = vector.multi_reduction <add>, %30, %cst_13 [1] : vector<64x256xf32> to vector<64xf32>
    %33 = vector.shape_cast %32 : vector<64xf32> to vector<64x1xf32>
    %c0_14 = arith.constant 0 : index
    %c1_15 = arith.constant 1 : index
    %34 = vector.load %arg6[%c0_14, %c1_15] : memref<64x3xf32, #tpu.memory_space<vmem>>, vector<64x1xf32>
    tpu.vector_store %arg6[%c0_14, %c1_15], %33 {strides = array<i32>} : memref<64x3xf32, #tpu.memory_space<vmem>>, vector<64x1xf32>,
    %35 = arith.mulf %30, %21 : vector<64x256xf32>
    %cst_16 = arith.constant dense<0.000000e+00> : vector<64xf32>
    %36 = vector.multi_reduction <add>, %35, %cst_16 [1] : vector<64x256xf32> to vector<64xf32>
    %37 = vector.shape_cast %36 : vector<64xf32> to vector<64x1xf32>
    %c0_17 = arith.constant 0 : index
    %c2 = arith.constant 2 : index
    %38 = vector.load %arg6[%c0_17, %c2] : memref<64x3xf32, #tpu.memory_space<vmem>>, vector<64x1xf32>
    tpu.vector_store %arg6[%c0_17, %c2], %37 {strides = array<i32>} : memref<64x3xf32, #tpu.memory_space<vmem>>, vector<64x1xf32>,
    %39 = vector.broadcast %10 : vector<1x256xf32> to vector<64x256xf32>
    %40 = arith.subf %5, %39 : vector<64x256xf32>
    %41 = vector.broadcast %9 : vector<1x256xf32> to vector<64x256xf32>
    %42 = arith.mulf %40, %41 : vector<64x256xf32>
    %c0_18 = arith.constant 0 : index
    %c0_19 = arith.constant 0 : index
    %43 = vector.load %arg8[%c0_18, %c0_19] : memref<1x256xf32, #tpu.memory_space<vmem>>, vector<1x256xf32>
    %cst_20 = arith.constant dense<0xFF800000> : vector<256xf32>
    %44 = vector.multi_reduction <maximumf>, %42, %cst_20 [0] : vector<64x256xf32> to vector<256xf32>
    %45 = vector.shape_cast %44 : vector<256xf32> to vector<1x256xf32>
    %46 = arith.maximumf %45, %43 : vector<1x256xf32>
    %47 = arith.subf %43, %46 : vector<1x256xf32>
    %48 = math.exp %47 : vector<1x256xf32>
    %49 = vector.broadcast %46 : vector<1x256xf32> to vector<64x256xf32>
    %50 = arith.subf %42, %49 : vector<64x256xf32>
    %51 = math.exp %50 : vector<64x256xf32>
    %cst_21 = arith.constant 0.000000e+00 : f32
    %52 = vector.broadcast %cst_21 : f32 to vector<64x256xf32>
    %53 = arith.select %19, %51, %52 : vector<64x256xi1>, vector<64x256xf32>
    %c0_22 = arith.constant 0 : index
    %c0_23 = arith.constant 0 : index
    %54 = vector.load %arg9[%c0_22, %c0_23] : memref<1x256xf32, #tpu.memory_space<vmem>>, vector<1x256xf32>
    %55 = arith.mulf %54, %48 : vector<1x256xf32>
    %cst_24 = arith.constant dense<0.000000e+00> : vector<256xf32>
    %56 = vector.multi_reduction <add>, %53, %cst_24 [0] : vector<64x256xf32> to vector<256xf32>
    %57 = vector.shape_cast %56 : vector<256xf32> to vector<1x256xf32>
    %58 = arith.addf %55, %57 : vector<1x256xf32>
    %c0_25 = arith.constant 0 : index
    %c0_26 = arith.constant 0 : index
    %59 = vector.load %arg9[%c0_25, %c0_26] : memref<1x256xf32, #tpu.memory_space<vmem>>, vector<1x256xf32>
    tpu.vector_store %arg9[%c0_25, %c0_26], %58 {strides = array<i32>} : memref<1x256xf32, #tpu.memory_space<vmem>>, vector<1x256xf32>,
    %c0_27 = arith.constant 0 : index
    %c0_28 = arith.constant 0 : index
    %60 = vector.load %arg10[%c0_27, %c0_28] : memref<1x256xf32, #tpu.memory_space<vmem>>, vector<1x256xf32>
    %61 = arith.mulf %60, %48 : vector<1x256xf32>
    %62 = arith.mulf %53, %40 : vector<64x256xf32>
    %cst_29 = arith.constant dense<0.000000e+00> : vector<256xf32>
    %63 = vector.multi_reduction <add>, %62, %cst_29 [0] : vector<64x256xf32> to vector<256xf32>
    %64 = vector.shape_cast %63 : vector<256xf32> to vector<1x256xf32>
    %65 = arith.addf %61, %64 : vector<1x256xf32>
    %c0_30 = arith.constant 0 : index
    %c0_31 = arith.constant 0 : index
    %66 = vector.load %arg10[%c0_30, %c0_31] : memref<1x256xf32, #tpu.memory_space<vmem>>, vector<1x256xf32>
    tpu.vector_store %arg10[%c0_30, %c0_31], %65 {strides = array<i32>} : memref<1x256xf32, #tpu.memory_space<vmem>>, vector<1x256xf32>,
    %c0_32 = arith.constant 0 : index
    %c0_33 = arith.constant 0 : index
    %67 = vector.load %arg8[%c0_32, %c0_33] : memref<1x256xf32, #tpu.memory_space<vmem>>, vector<1x256xf32>
    tpu.vector_store %arg8[%c0_32, %c0_33], %46 {strides = array<i32>} : memref<1x256xf32, #tpu.memory_space<vmem>>, vector<1x256xf32>,
    %c1_i32 = arith.constant 1 : i32
    %68 = arith.cmpi eq, %arg1, %c1_i32 : i32
    %69 = arith.extui %68 : i1 to i32
    %c0_i32_34 = arith.constant 0 : i32
    %70 = arith.cmpi ne, %69, %c0_i32_34 : i32
    scf.if %70 {
      %c0_35 = arith.constant 0 : index
      %c0_36 = arith.constant 0 : index
      %71 = vector.load %arg8[%c0_35, %c0_36] : memref<1x256xf32, #tpu.memory_space<vmem>>, vector<1x256xf32>
      %c0_37 = arith.constant 0 : index
      %c0_38 = arith.constant 0 : index
      %c0_39 = arith.constant 0 : index
      %72 = vector.load %arg7[%c0_37, %c0_38, %c0_39] : memref<1x3x256xf32, #tpu.memory_space<vmem>>, vector<1x1x256xf32>
      %73 = vector.shape_cast %72 : vector<1x1x256xf32> to vector<1x256xf32>
      %74 = vector.shape_cast %71 : vector<1x256xf32> to vector<1x1x256xf32>
      tpu.vector_store %arg7[%c0_37, %c0_38, %c0_39], %74 {strides = array<i32>} : memref<1x3x256xf32, #tpu.memory_space<vmem>>, vector<1x1x256xf32>,
      %c0_40 = arith.constant 0 : index
      %c0_41 = arith.constant 0 : index
      %75 = vector.load %arg9[%c0_40, %c0_41] : memref<1x256xf32, #tpu.memory_space<vmem>>, vector<1x256xf32>
      %c0_42 = arith.constant 0 : index
      %c1_43 = arith.constant 1 : index
      %c0_44 = arith.constant 0 : index
      %76 = vector.load %arg7[%c0_42, %c1_43, %c0_44] : memref<1x3x256xf32, #tpu.memory_space<vmem>>, vector<1x1x256xf32>
      %77 = vector.shape_cast %76 : vector<1x1x256xf32> to vector<1x256xf32>
      %78 = vector.shape_cast %75 : vector<1x256xf32> to vector<1x1x256xf32>
      tpu.vector_store %arg7[%c0_42, %c1_43, %c0_44], %78 {strides = array<i32>} : memref<1x3x256xf32, #tpu.memory_space<vmem>>, vector<1x1x256xf32>,
      %c0_45 = arith.constant 0 : index
      %c0_46 = arith.constant 0 : index
      %79 = vector.load %arg10[%c0_45, %c0_46] : memref<1x256xf32, #tpu.memory_space<vmem>>, vector<1x256xf32>
      %c0_47 = arith.constant 0 : index
      %c2_48 = arith.constant 2 : index
      %c0_49 = arith.constant 0 : index
      %80 = vector.load %arg7[%c0_47, %c2_48, %c0_49] : memref<1x3x256xf32, #tpu.memory_space<vmem>>, vector<1x1x256xf32>
      %81 = vector.shape_cast %80 : vector<1x1x256xf32> to vector<1x256xf32>
      %82 = vector.shape_cast %79 : vector<1x256xf32> to vector<1x1x256xf32>
      tpu.vector_store %arg7[%c0_47, %c2_48, %c0_49], %82 {strides = array<i32>} : memref<1x3x256xf32, #tpu.memory_space<vmem>>, vector<1x1x256xf32>,
    } else {
    }
    return
  }
  func.func @transform_0(%arg0: i32, %arg1: i32) -> (i32, i32) {
    %c2_i32 = arith.constant 2 : i32
    %0 = arith.muli %arg0, %c2_i32 : i32
    %1 = arith.addi %0, %arg1 : i32
    %c0_i32 = arith.constant 0 : i32
    %c0_i32_0 = arith.constant 0 : i32
    return %1, %c0_i32 : i32, i32
  }
  func.func @transform_1(%arg0: i32, %arg1: i32) -> (i32, i32) {
    %c0_i32 = arith.constant 0 : i32
    %c0_i32_0 = arith.constant 0 : i32
    %c0_i32_1 = arith.constant 0 : i32
    return %c0_i32, %c0_i32_0 : i32, i32
  }
  func.func @transform_2(%arg0: i32, %arg1: i32) -> (i32, i32) {
    %c2_i32 = arith.constant 2 : i32
    %0 = arith.muli %arg0, %c2_i32 : i32
    %1 = arith.addi %0, %arg1 : i32
    %c0_i32 = arith.constant 0 : i32
    %c0_i32_0 = arith.constant 0 : i32
    return %1, %c0_i32 : i32, i32
  }
  func.func @transform_3(%arg0: i32, %arg1: i32) -> (i32, i32) {
    %c0_i32 = arith.constant 0 : i32
    %c0_i32_0 = arith.constant 0 : i32
    %c0_i32_1 = arith.constant 0 : i32
    return %c0_i32, %c0_i32_0 : i32, i32
  }
  func.func @transform_4(%arg0: i32, %arg1: i32) -> (i32, i32) {
    %c2_i32 = arith.constant 2 : i32
    %0 = arith.muli %arg0, %c2_i32 : i32
    %1 = arith.addi %0, %arg1 : i32
    %c0_i32 = arith.constant 0 : i32
    %c0_i32_0 = arith.constant 0 : i32
    return %1, %c0_i32 : i32, i32
  }
  func.func @transform_5(%arg0: i32, %arg1: i32) -> (i32, i32, i32) {
    %c0_i32 = arith.constant 0 : i32
    %c0_i32_0 = arith.constant 0 : i32
    %c0_i32_1 = arith.constant 0 : i32
    return %arg0, %c0_i32, %c0_i32_0 : i32, i32, i32
  }
}

</mosaic_0001>

<llo_original>
// kernel: tpu_custom_call.1
$region0: #{tpu_custom_call.1}
  #allocation0 [shape = 'u32[]', space=smem, size = 0x4, offset = 0x4, fixed_abs, tag = 'smem constant byte address 0x4 - core index']
  #allocation1 [shape = 'u32[144,128]{1,0:T(1,128)}', space=vmem, size = 0x12000, scoped, tag = 'internal scratch']
  #allocation2 [shape = 'f32[1,256]{1,0:T(1,128)}', space=vmem, size = 0x400, scoped, tag = 'scratch operand']
  #allocation3 [shape = 'f32[1,256]{1,0:T(1,128)}', space=vmem, size = 0x400, scoped, tag = 'scratch operand']
  #allocation4 [shape = 'f32[1,256]{1,0:T(1,128)}', space=vmem, size = 0x400, scoped, tag = 'scratch operand']
  %s0 = inlined_call_operand.vmem [shape: bf16[256,128], index: 0, kind: input, shape index: {}]
  %s1 = inlined_call_operand.vmem [shape: bf16[128,256], index: 1, kind: input, shape index: {}]
  %s2 = inlined_call_operand.vmem [shape: f32[256,2], index: 2, kind: input, shape index: {}]
  %s3 = inlined_call_operand.vmem [shape: f32[2,256], index: 3, kind: input, shape index: {}]
  %s4 = inlined_call_operand.vmem [shape: f32[256,3], index: 4, kind: output, shape index: {0}]
  %s5 = inlined_call_operand.vmem [shape: f32[2,3,256], index: 5, kind: output, shape index: {1}]
  %6 = xla_tuple %s4, %s5
  %s7 = sld [smem:[#allocation0]]
  $region65: #{tpu_custom_call.1} parent=0
    _
  %s9 = ssub.s32 1, %s7
  %s10 = scalar_select 0, %s9, %s7
  loop: start=0, step=1, limit=6
  $region2: #{tpu_custom_call.1} parent=0 // loop_pre_header
    _
  $region3: #{tpu_custom_call.1} parent=0 // loop_header
    %s12 = sphi 0, %s16
    %p13 = scmp.ge.s32.totalorder %s12, 6
    %s19 = sphi 0, %s31
    %s20 = sphi 0, %s27
    %s21 = sphi 0, %s19
    %s22 = sphi 0, %s20
    %s23 = sphi 0, %s21
    %s24 = sphi 0, %s22
    %s38 = sphi 0, %s40
    %s41 = sphi 0, %s38
    %s42 = sphi 0, %s41
    %s58 = sphi 0, %s42
    %s62 = sphi 0, %s62
    %s64 = sphi 0, %s62
    %s65 = sphi 0, %s64
    %s79 = sphi 0, %s65
    %s89 = sphi 0, %s91
    %s92 = sphi 0, %s89
    %s93 = sphi 0, %s92
    %s109 = sphi 0, %s93
    %s113 = sphi 0, %s113
    %s115 = sphi 0, %s113
    %s116 = sphi 0, %s115
    %s130 = sphi 0, %s116
    %s140 = sphi 0, %s142
    %s143 = sphi 0, %s140
    %s144 = sphi 0, %s143
    %s160 = sphi 0, %s144
    %s166 = sphi 0, %s168
    %s169 = sphi 0, %s166
    %s170 = sphi 0, %s169
    %s186 = sphi 0, %s170
  $region4: #{tpu_custom_call.1} parent=0 // loop_header_branch
    %15 = sbr.rel (%p13) target = $region8
  $region5: #{tpu_custom_call.1} parent=0 // loop_body
    %s17 = ssub.s32 %s12, 1
    %s18 = ssub.s32 %s12, 2
    %s25 = sadd.s32 1, %s20
    %p26 = scmp.ge.s32.totalorder %s25, 2
    %s27 = scalar_select %p26, 0, %s25
    %s28 = sadd.s32 1, %s19
    %s29 = scalar_select %p26, %s28, %s19
    %p30 = scmp.ge.s32.totalorder %s29, 2
    %s31 = scalar_select %p30, 0, %s29
    %s32 = smul.u32 %s19, 2
    %s33 = sadd.s32 %s32, %s20
    %s34 = smul.u32 %s31, 2
    %s35 = sadd.s32 %s34, %s27
    %s36 = ssub.s32 %s33, %s35
    %p37 = scmp.eq.s32.totalorder %s36, 0
    %s39 = sadd.s32 %s38, 1
    %s40 = scalar_select %p37, %s38, %s39
    %p43 = pneg %p37
    %p44 = scmp.eq.s32.totalorder %s12, 3
    %p45 = por %p43, %p44
    %p46 = scmp.ne.s32.totalorder %s38, %s41
    %p47 = scmp.eq.s32.totalorder %s12, 0
    %p48 = por %p46, %p47
    %p49 = scmp.ne.s32.totalorder %s38, %s41
    %p50 = scmp.eq.s32.totalorder %s17, 3
    %p51 = por %p49, %p50
    %p52 = scmp.ne.s32.totalorder %s41, %s42
    %p53 = scmp.eq.s32.totalorder %s17, 0
    %p54 = por %p52, %p53
    %p55 = scmp.ne.s32.totalorder %s41, %s42
    %p56 = scmp.eq.s32.totalorder %s18, 3
    %p57 = por %p55, %p56
    %p59 = scmp.ne.s32.totalorder %s42, %s58
    %p60 = scmp.eq.s32.totalorder %s18, 0
    %p61 = por %p59, %p60
    %s63 = sadd.s32 %s62, 1
    %p66 = scmp.eq.s32.totalorder %s12, 3
    %p67 = scmp.ne.s32.totalorder %s62, %s64
    %p68 = scmp.eq.s32.totalorder %s12, 0
    %p69 = por %p67, %p68
    %p70 = scmp.ne.s32.totalorder %s62, %s64
    %p71 = scmp.eq.s32.totalorder %s17, 3
    %p72 = por %p70, %p71
    %p73 = scmp.ne.s32.totalorder %s64, %s65
    %p74 = scmp.eq.s32.totalorder %s17, 0
    %p75 = por %p73, %p74
    %p76 = scmp.ne.s32.totalorder %s64, %s65
    %p77 = scmp.eq.s32.totalorder %s18, 3
    %p78 = por %p76, %p77
    %p80 = scmp.ne.s32.totalorder %s65, %s79
    %p81 = scmp.eq.s32.totalorder %s18, 0
    %p82 = por %p80, %p81
    %s83 = smul.u32 %s19, 2
    %s84 = sadd.s32 %s83, %s20
    %s85 = smul.u32 %s31, 2
    %s86 = sadd.s32 %s85, %s27
    %s87 = ssub.s32 %s84, %s86
    %p88 = scmp.eq.s32.totalorder %s87, 0
    %s90 = sadd.s32 %s89, 1
    %s91 = scalar_select %p88, %s89, %s90
    %p94 = pneg %p88
    %p95 = scmp.eq.s32.totalorder %s12, 3
    %p96 = por %p94, %p95
    %p97 = scmp.ne.s32.totalorder %s89, %s92
    %p98 = scmp.eq.s32.totalorder %s12, 0
    %p99 = por %p97, %p98
    %p100 = scmp.ne.s32.totalorder %s89, %s92
    %p101 = scmp.eq.s32.totalorder %s17, 3
    %p102 = por %p100, %p101
    %p103 = scmp.ne.s32.totalorder %s92, %s93
    %p104 = scmp.eq.s32.totalorder %s17, 0
    %p105 = por %p103, %p104
    %p106 = scmp.ne.s32.totalorder %s92, %s93
    %p107 = scmp.eq.s32.totalorder %s18, 3
    %p108 = por %p106, %p107
    %p110 = scmp.ne.s32.totalorder %s93, %s109
    %p111 = scmp.eq.s32.totalorder %s18, 0
    %p112 = por %p110, %p111
    %s114 = sadd.s32 %s113, 1
    %p117 = scmp.eq.s32.totalorder %s12, 3
    %p118 = scmp.ne.s32.totalorder %s113, %s115
    %p119 = scmp.eq.s32.totalorder %s12, 0
    %p120 = por %p118, %p119
    %p121 = scmp.ne.s32.totalorder %s113, %s115
    %p122 = scmp.eq.s32.totalorder %s17, 3
    %p123 = por %p121, %p122
    %p124 = scmp.ne.s32.totalorder %s115, %s116
    %p125 = scmp.eq.s32.totalorder %s17, 0
    %p126 = por %p124, %p125
    %p127 = scmp.ne.s32.totalorder %s115, %s116
    %p128 = scmp.eq.s32.totalorder %s18, 3
    %p129 = por %p127, %p128
    %p131 = scmp.ne.s32.totalorder %s116, %s130
    %p132 = scmp.eq.s32.totalorder %s18, 0
    %p133 = por %p131, %p132
    %s134 = smul.u32 %s19, 2
    %s135 = sadd.s32 %s134, %s20
    %s136 = smul.u32 %s31, 2
    %s137 = sadd.s32 %s136, %s27
    %s138 = ssub.s32 %s135, %s137
    %p139 = scmp.eq.s32.totalorder %s138, 0
    %s141 = sadd.s32 %s140, 1
    %s142 = scalar_select %p139, %s140, %s141
    %p145 = pneg %p139
    %p146 = scmp.eq.s32.totalorder %s12, 3
    %p147 = por %p145, %p146
    %p148 = scmp.ne.s32.totalorder %s140, %s143
    %p149 = scmp.eq.s32.totalorder %s12, 0
    %p150 = por %p148, %p149
    %p151 = scmp.ne.s32.totalorder %s140, %s143
    %p152 = scmp.eq.s32.totalorder %s17, 3
    %p153 = por %p151, %p152
    %p154 = scmp.ne.s32.totalorder %s143, %s144
    %p155 = scmp.eq.s32.totalorder %s17, 0
    %p156 = por %p154, %p155
    %p157 = scmp.ne.s32.totalorder %s143, %s144
    %p158 = scmp.eq.s32.totalorder %s18, 3
    %p159 = por %p157, %p158
    %p161 = scmp.ne.s32.totalorder %s144, %s160
    %p162 = scmp.eq.s32.totalorder %s18, 0
    %p163 = por %p161, %p162
    %s164 = ssub.s32 %s19, %s31
    %p165 = scmp.eq.s32.totalorder %s164, 0
    %s167 = sadd.s32 %s166, 1
    %s168 = scalar_select %p165, %s166, %s167
    %p171 = pneg %p165
    %p172 = scmp.eq.s32.totalorder %s12, 3
    %p173 = por %p171, %p172
    %p174 = scmp.ne.s32.totalorder %s166, %s169
    %p175 = scmp.eq.s32.totalorder %s12, 0
    %p176 = por %p174, %p175
    %p177 = scmp.ne.s32.totalorder %s166, %s169
    %p178 = scmp.eq.s32.totalorder %s17, 3
    %p179 = por %p177, %p178
    %p180 = scmp.ne.s32.totalorder %s169, %s170
    %p181 = scmp.eq.s32.totalorder %s17, 0
    %p182 = por %p180, %p181
    %p183 = scmp.ne.s32.totalorder %s169, %s170
    %p184 = scmp.eq.s32.totalorder %s18, 3
    %p185 = por %p183, %p184
    %p187 = scmp.ne.s32.totalorder %s170, %s186
    %p188 = scmp.eq.s32.totalorder %s18, 0
    %p189 = por %p187, %p188
    %p190 = scmp.le.s32.totalorder 1, %s12
    %p191 = scmp.lt.s32.totalorder %s12, 5
    %p192 = pnand %p190, %p191
    %p193 = pneg %p192
    // Predicated region
    $region9: #{tpu_custom_call.1} parent=5 // pred_check
      _
    $region10: #{tpu_custom_call.1} parent=5 // pred_check_branch
      %195 = sbr.rel (%p192) target = $region12
    $region11: #{tpu_custom_call.1} parent=5 // pred_region
      %s196 = ssub.s32 %s12, 1
      // Predicated region
      $region13: #{tpu_custom_call.1} parent=11 // pred_check
        %p197 = pneg %p75
      $region14: #{tpu_custom_call.1} parent=11 // pred_check_branch
        %199 = sbr.rel (%p197) target = $region16
      $region15: #{tpu_custom_call.1} parent=11 // pred_region
        _
      $region16: #{tpu_custom_call.1} parent=11 // pred_fallthru
        _
      // Predicated region
      $region17: #{tpu_custom_call.1} parent=11 // pred_check
        %p200 = pneg %p126
      $region18: #{tpu_custom_call.1} parent=11 // pred_check_branch
        %202 = sbr.rel (%p200) target = $region20
      $region19: #{tpu_custom_call.1} parent=11 // pred_region
        _
      $region20: #{tpu_custom_call.1} parent=11 // pred_fallthru
        _
    $region12: #{tpu_custom_call.1} parent=5 // pred_fallthru
      _
    %p203 = scmp.lt.s32.totalorder %s12, 4
    // Predicated region
    $region21: #{tpu_custom_call.1} parent=5 // pred_check
      %p204 = pneg %p203
    $region22: #{tpu_custom_call.1} parent=5 // pred_check_branch
      %206 = sbr.rel (%p204) target = $region24
    $region23: #{tpu_custom_call.1} parent=5 // pred_region
      // Predicated region
      $region25: #{tpu_custom_call.1} parent=23 // pred_check
        %p207 = pneg %p48
      $region26: #{tpu_custom_call.1} parent=23 // pred_check_branch
        %209 = sbr.rel (%p207) target = $region28
      $region27: #{tpu_custom_call.1} parent=23 // pred_region
        %s210 = smul.u32 %s19, 2
        %s211 = sadd.s32 %s210, %s20
        %s212 = smul.u32 8, %s211
        %p213 = scmp.lt.s32.totalorder %s212, 31
        %s214 = scalar_select %p213, %s212, 31
        %s215 = smul.addr %s214, 4
        %s216 = scalar_lea.vmem %s0, %s215
        %s217 = smul.u32 %s19, 2
        %s218 = sadd.s32 %s217, %s20
        %s219 = smul.u32 8, %s218
      $region28: #{tpu_custom_call.1} parent=23 // pred_fallthru
        _
      // Predicated region
      $region29: #{tpu_custom_call.1} parent=23 // pred_check
        %p220 = pneg %p99
      $region30: #{tpu_custom_call.1} parent=23 // pred_check_branch
        %222 = sbr.rel (%p220) target = $region32
      $region31: #{tpu_custom_call.1} parent=23 // pred_region
        %s223 = smul.u32 %s19, 2
        %s224 = sadd.s32 %s223, %s20
        %s225 = smul.u32 8, %s224
        %p226 = scmp.lt.s32.totalorder %s225, 31
        %s227 = scalar_select %p226, %s225, 31
        %s228 = smul.addr %s227, 8
        %s229 = scalar_lea.vmem %s2, %s228
        %s230 = smul.u32 %s19, 2
        %s231 = sadd.s32 %s230, %s20
        %s232 = smul.u32 8, %s231
      $region32: #{tpu_custom_call.1} parent=23 // pred_fallthru
        _
    $region24: #{tpu_custom_call.1} parent=5 // pred_fallthru
      _
    %p233 = scmp.le.s32.totalorder 1, %s12
    %p234 = scmp.lt.s32.totalorder %s12, 5
    %p235 = pnand %p233, %p234
    %p236 = pneg %p235
    // Predicated region
    $region33: #{tpu_custom_call.1} parent=5 // pred_check
      _
    $region34: #{tpu_custom_call.1} parent=5 // pred_check_branch
      %238 = sbr.rel (%p235) target = $region36
    $region35: #{tpu_custom_call.1} parent=5 // pred_region
      %s239 = ssub.s32 %s12, 1
      %s240 = smul.u32 %s21, 2
      %s241 = sadd.s32 %s240, %s22
      %s242 = smul.u32 8, %s241
      %p243 = scmp.lt.s32.totalorder %s242, 31
      %s244 = scalar_select %p243, %s242, 31
      %s245 = smul.addr %s244, 4
      %s246 = scalar_lea.vmem %s0, %s245
      %p247 = pneg %p54
      %p248 = pneg %p51
      %p249 = pneg %p75
      %p250 = pneg %p72
      %s251 = smul.u32 %s21, 2
      %s252 = sadd.s32 %s251, %s22
      %s253 = smul.u32 8, %s252
      %p254 = scmp.lt.s32.totalorder %s253, 31
      %s255 = scalar_select %p254, %s253, 31
      %s256 = smul.addr %s255, 8
      %s257 = scalar_lea.vmem %s2, %s256
      %p258 = pneg %p105
      %p259 = pneg %p102
      %p260 = pneg %p126
      %p261 = pneg %p123
      %p262 = pneg %p156
      %p263 = pneg %p153
      %s264 = smul.u32 %s21, 2
      %s265 = sadd.s32 %s264, %s22
      %s266 = smul.u32 8, %s265
      %p267 = scmp.lt.s32.totalorder %s266, 31
      %s268 = scalar_select %p267, %s266, 31
      %s269 = smul.addr %s268, 8
      %s270 = scalar_lea.vmem %s4, %s269
      %p271 = pneg %p182
      %p272 = pneg %p179
      %p273 = scmp.lt.s32.totalorder %s21, 1
      %s274 = scalar_select %p273, %s21, 1
      %s275 = smul.addr %s274, 2
      %s276 = smul.addr %s275, 4
      %s277 = scalar_lea.vmem %s5, %s276
      %s278 = smul.u32 %s21, 2
      %s279 = sadd.s32 %s278, %s22
      %s280 = smul.u32 8, %s279
      %p281 = scmp.lt.s32.totalorder %s280, 31
      %s282 = scalar_select %p281, %s280, 31
      %s283 = smul.addr %s282, 4
      %s284 = scalar_lea.vmem %s0, %s283
      %s285 = smul.u32 %s21, 2
      %s286 = sadd.s32 %s285, %s22
      %s287 = smul.u32 8, %s286
      %s288 = smul.u32 %s21, 2
      %s289 = sadd.s32 %s288, %s22
      %s290 = smul.u32 8, %s289
      %p291 = scmp.lt.s32.totalorder %s290, 31
      %s292 = scalar_select %p291, %s290, 31
      %s293 = smul.addr %s292, 8
      %s294 = scalar_lea.vmem %s2, %s293
      %s295 = smul.u32 %s21, 2
      %s296 = sadd.s32 %s295, %s22
      %s297 = smul.u32 8, %s296
      %s298 = smul.u32 %s21, 2
      %s299 = sadd.s32 %s298, %s22
      %s300 = smul.u32 8, %s299
      %p301 = scmp.lt.s32.totalorder %s300, 31
      %s302 = scalar_select %p301, %s300, 31
      %s303 = smul.addr %s302, 8
      %s304 = scalar_lea.vmem %s4, %s303
      %s305 = smul.u32 %s21, 2
      %s306 = sadd.s32 %s305, %s22
      %s307 = smul.u32 8, %s306
      %p308 = scmp.lt.s32.totalorder %s21, 1
      %s309 = scalar_select %p308, %s21, 1
      %s310 = smul.addr %s309, 2
      %s311 = smul.addr %s310, 4
      %s312 = scalar_lea.vmem %s5, %s311
      %p314 = scmp.eq.s32.totalorder %s22, 0
      // Predicated region
      $region37: #{tpu_custom_call.1} parent=35 // pred_check
        %p315 = pneg %p314
      $region38: #{tpu_custom_call.1} parent=35 // pred_check_branch
        %317 = sbr.rel (%p315) target = $region40
      $region39: #{tpu_custom_call.1} parent=35 // pred_region
        %v318 = vlaneseq
        %vm319 = vcmp.ge.s32.totalorder %v318, 0
        %vm320 = vcmp.lt.s32.totalorder %v318, 256
        %vm321 = vmand %vm319, %vm320
        %322 = vst.msk [vmem:[#allocation2] sm:$0x3] %vm321, 0.0
        %323 = vst.msk [vmem:[#allocation3] sm:$0x3] %vm321, 0.0
        %324 = vst.msk [vmem:[#allocation4] sm:$0x3] %vm321, 0.0
      $region40: #{tpu_custom_call.1} parent=35 // pred_fallthru
        _
      %v325 = vld [vmem:[%s284] sm:$0xf]
      %v326 = vld [vmem:[%s284 + $0x4] sm:$0xf]
      %v327 = vld [vmem:[%s284 + $0x8] sm:$0xf]
      %v328 = vld [vmem:[%s284 + $0xc] sm:$0xf]
      %v329 = vld [vmem:[%s284 + $0x10] sm:$0xf]
      %v330 = vld [vmem:[%s284 + $0x14] sm:$0xf]
      %v331 = vld [vmem:[%s284 + $0x18] sm:$0xf]
      %v332 = vld [vmem:[%s284 + $0x1c] sm:$0xf]
      %v333 = vld [vmem:[%s1] sm:$0xff]
      %v334 = vld [vmem:[%s1 + $0x8] sm:$0xff]
      %v335 = vld [vmem:[%s1 + $0x10] sm:$0xff]
      %v336 = vld [vmem:[%s1 + $0x18] sm:$0xff]
      %v337 = vld [vmem:[%s1 + $0x20] sm:$0xff]
      %v338 = vld [vmem:[%s1 + $0x28] sm:$0xff]
      %v339 = vld [vmem:[%s1 + $0x30] sm:$0xff]
      %v340 = vld [vmem:[%s1 + $0x38] sm:$0xff]
      %v341 = vld [vmem:[%s1 + $0x40] sm:$0xff]
      %v342 = vld [vmem:[%s1 + $0x48] sm:$0xff]
      %v343 = vld [vmem:[%s1 + $0x50] sm:$0xff]
      %v344 = vld [vmem:[%s1 + $0x58] sm:$0xff]
      %v345 = vld [vmem:[%s1 + $0x60] sm:$0xff]
      %v346 = vld [vmem:[%s1 + $0x68] sm:$0xff]
      %v347 = vld [vmem:[%s1 + $0x70] sm:$0xff]
      %v348 = vld [vmem:[%s1 + $0x78] sm:$0xff]
      %v357 = vunpack.c.l.b16 %v325
      %v358 = vunpack.c.l.b16 %v326
      %v359 = vunpack.c.l.b16 %v327
      %v360 = vunpack.c.l.b16 %v328
      %v361 = vunpack.c.l.b16 %v329
      %v362 = vunpack.c.l.b16 %v330
      %v363 = vunpack.c.l.b16 %v331
      %v364 = vunpack.c.l.b16 %v332
      %v365 = vpack.c.b16 %v358, %v357
      %v366 = vpack.c.b16 %v360, %v359
      %v367 = vpack.c.b16 %v362, %v361
      %v368 = vpack.c.b16 %v364, %v363
      %v389 = vunpack.c.l.b16 %v333
      %v390 = vunpack.c.h.b16 %v333
      %v391 = vunpack.c.l.b16 %v334
      %v392 = vunpack.c.h.b16 %v334
      %v393 = vunpack.c.l.b16 %v335
      %v394 = vunpack.c.h.b16 %v335
      %v395 = vunpack.c.l.b16 %v336
      %v396 = vunpack.c.h.b16 %v336
      %v397 = vunpack.c.l.b16 %v337
      %v398 = vunpack.c.h.b16 %v337
      %v399 = vunpack.c.l.b16 %v338
      %v400 = vunpack.c.h.b16 %v338
      %v401 = vunpack.c.l.b16 %v339
      %v402 = vunpack.c.h.b16 %v339
      %v403 = vunpack.c.l.b16 %v340
      %v404 = vunpack.c.h.b16 %v340
      %v405 = vunpack.c.l.b16 %v341
      %v406 = vunpack.c.h.b16 %v341
      %v407 = vunpack.c.l.b16 %v342
      %v408 = vunpack.c.h.b16 %v342
      %v409 = vunpack.c.l.b16 %v343
      %v410 = vunpack.c.h.b16 %v343
      %v411 = vunpack.c.l.b16 %v344
      %v412 = vunpack.c.h.b16 %v344
      %v413 = vunpack.c.l.b16 %v345
      %v414 = vunpack.c.h.b16 %v345
      %v415 = vunpack.c.l.b16 %v346
      %v416 = vunpack.c.h.b16 %v346
      %v417 = vunpack.c.l.b16 %v347
      %v418 = vunpack.c.h.b16 %v347
      %v419 = vunpack.c.l.b16 %v348
      %v420 = vunpack.c.h.b16 %v348
      %v421 = vpack.c.b16 %v391, %v389
      %v422 = vpack.c.b16 %v392, %v390
      %v423 = vpack.c.b16 %v395, %v393
      %v424 = vpack.c.b16 %v396, %v394
      %v425 = vpack.c.b16 %v399, %v397
      %v426 = vpack.c.b16 %v400, %v398
      %v427 = vpack.c.b16 %v403, %v401
      %v428 = vpack.c.b16 %v404, %v402
      %v429 = vpack.c.b16 %v407, %v405
      %v430 = vpack.c.b16 %v408, %v406
      %v431 = vpack.c.b16 %v411, %v409
      %v432 = vpack.c.b16 %v412, %v410
      %v433 = vpack.c.b16 %v415, %v413
      %v434 = vpack.c.b16 %v416, %v414
      %v435 = vpack.c.b16 %v419, %v417
      %v436 = vpack.c.b16 %v420, %v418
      %453 = vmatprep.subr.bf16.mxu0 %v422
      %454 = vmatpush1.bf16.msra.mxu0 %v421
      %455 = vmatprep.subr.bf16.mxu0 %v424
      %456 = vmatpush1.bf16.msra.mxu0 %v423
      %457 = vmatprep.subr.bf16.mxu0 %v426
      %458 = vmatpush1.bf16.msra.mxu0 %v425
      %459 = vmatprep.subr.bf16.mxu0 %v428
      %460 = vmatpush1.bf16.msra.mxu0 %v427
      %461 = vmatprep.subr.bf16.mxu0 %v430
      %462 = vmatpush1.bf16.msra.mxu0 %v429
      %463 = vmatprep.subr.bf16.mxu0 %v432
      %464 = vmatpush1.bf16.msra.mxu0 %v431
      %465 = vmatprep.subr.bf16.mxu0 %v434
      %466 = vmatpush1.bf16.msra.mxu0 %v433
      %467 = vmatprep.subr.bf16.mxu0 %v436
      %468 = vmatpush1.bf16.msra.mxu0 %v435
      %469 = vmatprep.subr.bf16.mxu0 0
      %470 = vmatpush1.bf16.msra.mxu0 0
      %471 = vmatprep.subr.bf16.mxu0 0
      %472 = vmatpush1.bf16.msra.mxu0 0
      %473 = vmatprep.subr.bf16.mxu0 0
      %474 = vmatpush1.bf16.msra.mxu0 0
      %475 = vmatprep.subr.bf16.mxu0 0
      %476 = vmatpush1.bf16.msra.mxu0 0
      %477 = vmatprep.subr.bf16.mxu0 0
      %478 = vmatpush1.bf16.msra.mxu0 0
      %479 = vmatprep.subr.bf16.mxu0 0
      %480 = vmatpush1.bf16.msra.mxu0 0
      %481 = vmatprep.subr.bf16.mxu0 0
      %482 = vmatpush1.bf16.msra.mxu0 0
      %483 = vmatprep.subr.bf16.mxu0 0
      %484 = vmatpush1.bf16.msra.mxu0 0
      %485 = vmatprep.mubr.bf16.mxu0 0
      %486 = vmatmul.mubr.bf16.gmra.mrb[0].mxu0 %v365
      %v487 = vpop.f32.mrb[0].mxu0
      %v488 = vadd.f32 0.0, %v487
      %v489 = vpop.f32.mrb[0].mxu0
      %v490 = vadd.f32 0.0, %v489
      %v491 = vpop.f32.mrb[0].mxu0
      %v492 = vadd.f32 0.0, %v491
      %v493 = vpop.f32.mrb[0].mxu0
      %v494 = vadd.f32 0.0, %v493
      %495 = vmatprep.mubr.bf16.mxu0 0
      %496 = vmatmul.mubr.bf16.gmra.mrb[0].mxu0 %v366
      %v497 = vpop.f32.mrb[0].mxu0
      %v498 = vadd.f32 0.0, %v497
      %v499 = vpop.f32.mrb[0].mxu0
      %v500 = vadd.f32 0.0, %v499
      %v501 = vpop.f32.mrb[0].mxu0
      %v502 = vadd.f32 0.0, %v501
      %v503 = vpop.f32.mrb[0].mxu0
      %v504 = vadd.f32 0.0, %v503
      %505 = vmatprep.mubr.bf16.mxu0 0
      %506 = vmatmul.mubr.bf16.gmra.mrb[0].mxu0 %v367
      %v507 = vpop.f32.mrb[0].mxu0
      %v508 = vadd.f32 0.0, %v507
      %v509 = vpop.f32.mrb[0].mxu0
      %v510 = vadd.f32 0.0, %v509
      %v511 = vpop.f32.mrb[0].mxu0
      %v512 = vadd.f32 0.0, %v511
      %v513 = vpop.f32.mrb[0].mxu0
      %v514 = vadd.f32 0.0, %v513
      %515 = vmatprep.mubr.bf16.mxu0 0
      %516 = vmatmul.mubr.bf16.gmra.mrb[0].mxu0 %v368
      %v517 = vpop.f32.mrb[0].mxu0
      %v518 = vadd.f32 0.0, %v517
      %v519 = vpop.f32.mrb[0].mxu0
      %v520 = vadd.f32 0.0, %v519
      %v521 = vpop.f32.mrb[0].mxu0
      %v522 = vadd.f32 0.0, %v521
      %v523 = vpop.f32.mrb[0].mxu0
      %v524 = vadd.f32 0.0, %v523
      %525 = vdwg.mxu0
      %v526 = vld [vmem:[%s294] sm:$0xff]
      %v527 = vld [vmem:[%s294 + $0x8] sm:$0xff]
      %v528 = vld [vmem:[%s294 + $0x10] sm:$0xff]
      %v529 = vld [vmem:[%s294 + $0x18] sm:$0xff]
      %v530 = vld [vmem:[%s294 + $0x20] sm:$0xff]
      %v531 = vld [vmem:[%s294 + $0x28] sm:$0xff]
      %v532 = vld [vmem:[%s294 + $0x30] sm:$0xff]
      %v533 = vld [vmem:[%s294 + $0x38] sm:$0xff]
      %v534 = vld [vmem:[%s3] ss:$2 sm:$0x3]
      %s535 = scalar_lea.vmem %s3, 1
      %v536 = vld [vmem:[%s535] ss:$2 sm:$0x3]
      %s537 = smul.u32 %s21, 2
      %s538 = sadd.s32 %s537, %s22
      %s539 = smul.u32 %s538, 64
      %v540 = vlaneseq
      %v541 = vand.u32 %v540, 127
      %v542 = vadd.s32 %v541, 128
      %v543 = vlaneseq
      %v544 = vshrl.u32 %v543, 7
      %v545 = vadd.s32 %v544, 8
      %v546 = vadd.s32 %v544, 16
      %v547 = vadd.s32 %v544, 24
      %v548 = vadd.s32 %v544, 32
      %v549 = vadd.s32 %v544, 40
      %v550 = vadd.s32 %v544, 48
      %v551 = vadd.s32 %v544, 56
      %v552 = vstv %s539
      %v553 = vadd.s32 %v544, %v552
      %v554 = vadd.s32 %v545, %v552
      %v555 = vadd.s32 %v546, %v552
      %v556 = vadd.s32 %v547, %v552
      %v557 = vadd.s32 %v548, %v552
      %v558 = vadd.s32 %v549, %v552
      %v559 = vadd.s32 %v550, %v552
      %v560 = vadd.s32 %v551, %v552
      %vm561 = vcmp.ne.s32.totalorder %v541, %v553
      %vm562 = vcmp.ne.s32.totalorder %v542, %v553
      %vm563 = vcmp.ne.s32.totalorder %v541, %v554
      %vm564 = vcmp.ne.s32.totalorder %v542, %v554
      %vm565 = vcmp.ne.s32.totalorder %v541, %v555
      %vm566 = vcmp.ne.s32.totalorder %v542, %v555
      %vm567 = vcmp.ne.s32.totalorder %v541, %v556
      %vm568 = vcmp.ne.s32.totalorder %v542, %v556
      %vm569 = vcmp.ne.s32.totalorder %v541, %v557
      %vm570 = vcmp.ne.s32.totalorder %v542, %v557
      %vm571 = vcmp.ne.s32.totalorder %v541, %v558
      %vm572 = vcmp.ne.s32.totalorder %v542, %v558
      %vm573 = vcmp.ne.s32.totalorder %v541, %v559
      %vm574 = vcmp.ne.s32.totalorder %v542, %v559
      %vm575 = vcmp.ne.s32.totalorder %v541, %v560
      %vm576 = vcmp.ne.s32.totalorder %v542, %v560
      %578 = vset.pattern.permute.xlu0 1
      %579 = vperm.xlu0 %578, %v526
      %v580 = vpop.permute.xlu0 %579
      %583 = vset.pattern.permute.xlu0 1
      %584 = vperm.xlu0 %583, %v527
      %v585 = vpop.permute.xlu0 %584
      %588 = vset.pattern.permute.xlu0 1
      %589 = vperm.xlu0 %588, %v528
      %v590 = vpop.permute.xlu0 %589
      %593 = vset.pattern.permute.xlu0 1
      %594 = vperm.xlu0 %593, %v529
      %v595 = vpop.permute.xlu0 %594
      %598 = vset.pattern.permute.xlu0 1
      %599 = vperm.xlu0 %598, %v530
      %v600 = vpop.permute.xlu0 %599
      %603 = vset.pattern.permute.xlu0 1
      %604 = vperm.xlu0 %603, %v531
      %v605 = vpop.permute.xlu0 %604
      %608 = vset.pattern.permute.xlu0 1
      %609 = vperm.xlu0 %608, %v532
      %v610 = vpop.permute.xlu0 %609
      %613 = vset.pattern.permute.xlu0 1
      %614 = vperm.xlu0 %613, %v533
      %v615 = vpop.permute.xlu0 %614
      %v617 = vsub.f32 %v488, %v580
      %v618 = vsub.f32 %v490, %v580
      %v619 = vsub.f32 %v492, %v585
      %v620 = vsub.f32 %v494, %v585
      %v621 = vsub.f32 %v498, %v590
      %v622 = vsub.f32 %v500, %v590
      %v623 = vsub.f32 %v502, %v595
      %v624 = vsub.f32 %v504, %v595
      %v625 = vsub.f32 %v508, %v600
      %v626 = vsub.f32 %v510, %v600
      %v627 = vsub.f32 %v512, %v605
      %v628 = vsub.f32 %v514, %v605
      %v629 = vsub.f32 %v518, %v610
      %v630 = vsub.f32 %v520, %v610
      %v631 = vsub.f32 %v522, %v615
      %v632 = vsub.f32 %v524, %v615
      %633 = vset.pattern.permute.xlu0 0
      %634 = vperm.xlu0 %633, %v526
      %v635 = vpop.permute.xlu0 %634
      %637 = vset.pattern.permute.xlu0 0
      %638 = vperm.xlu0 %637, %v527
      %v639 = vpop.permute.xlu0 %638
      %641 = vset.pattern.permute.xlu0 0
      %642 = vperm.xlu0 %641, %v528
      %v643 = vpop.permute.xlu0 %642
      %645 = vset.pattern.permute.xlu0 0
      %646 = vperm.xlu0 %645, %v529
      %v647 = vpop.permute.xlu0 %646
      %649 = vset.pattern.permute.xlu0 0
      %650 = vperm.xlu0 %649, %v530
      %v651 = vpop.permute.xlu0 %650
      %653 = vset.pattern.permute.xlu0 0
      %654 = vperm.xlu0 %653, %v531
      %v655 = vpop.permute.xlu0 %654
      %657 = vset.pattern.permute.xlu0 0
      %658 = vperm.xlu0 %657, %v532
      %v659 = vpop.permute.xlu0 %658
      %661 = vset.pattern.permute.xlu0 0
      %662 = vperm.xlu0 %661, %v533
      %v663 = vpop.permute.xlu0 %662
      %v665 = vmul.f32 %v617, %v635
      %v666 = vmul.f32 %v618, %v635
      %v667 = vmul.f32 %v619, %v639
      %v668 = vmul.f32 %v620, %v639
      %v669 = vmul.f32 %v621, %v643
      %v670 = vmul.f32 %v622, %v643
      %v671 = vmul.f32 %v623, %v647
      %v672 = vmul.f32 %v624, %v647
      %v673 = vmul.f32 %v625, %v651
      %v674 = vmul.f32 %v626, %v651
      %v675 = vmul.f32 %v627, %v655
      %v676 = vmul.f32 %v628, %v655
      %v677 = vmul.f32 %v629, %v659
      %v678 = vmul.f32 %v630, %v659
      %v679 = vmul.f32 %v631, %v663
      %v680 = vmul.f32 %v632, %v663
      %v681 = vmax.f32 %v665, %v666
      %682 = vmax.xlane.f32.xlu0 %v681
      %v683 = vpop.xlane.xlu0 %682
      %v684 = vmax.f32 %v667, %v668
      %685 = vmax.xlane.f32.xlu0 %v684
      %v686 = vpop.xlane.xlu0 %685
      %v687 = vmax.f32 %v669, %v670
      %688 = vmax.xlane.f32.xlu0 %v687
      %v689 = vpop.xlane.xlu0 %688
      %v690 = vmax.f32 %v671, %v672
      %691 = vmax.xlane.f32.xlu0 %v690
      %v692 = vpop.xlane.xlu0 %691
      %v693 = vmax.f32 %v673, %v674
      %694 = vmax.xlane.f32.xlu0 %v693
      %v695 = vpop.xlane.xlu0 %694
      %v696 = vmax.f32 %v675, %v676
      %697 = vmax.xlane.f32.xlu0 %v696
      %v698 = vpop.xlane.xlu0 %697
      %v699 = vmax.f32 %v677, %v678
      %700 = vmax.xlane.f32.xlu0 %v699
      %v701 = vpop.xlane.xlu0 %700
      %v702 = vmax.f32 %v679, %v680
      %703 = vmax.xlane.f32.xlu0 %v702
      %v704 = vpop.xlane.xlu0 %703
      %v705 = vsub.f32 %v665, %v683
      %v706 = vsub.f32 %v666, %v683
      %v707 = vsub.f32 %v667, %v686
      %v708 = vsub.f32 %v668, %v686
      %v709 = vsub.f32 %v669, %v689
      %v710 = vsub.f32 %v670, %v689
      %v711 = vsub.f32 %v671, %v692
      %v712 = vsub.f32 %v672, %v692
      %v713 = vsub.f32 %v673, %v695
      %v714 = vsub.f32 %v674, %v695
      %v715 = vsub.f32 %v675, %v698
      %v716 = vsub.f32 %v676, %v698
      %v717 = vsub.f32 %v677, %v701
      %v718 = vsub.f32 %v678, %v701
      %v719 = vsub.f32 %v679, %v704
      %v720 = vsub.f32 %v680, %v704
      %v721 = vmul.f32 %v705, 1.442695
      %v722 = vpow.pop %v721
      %v723 = vmul.f32 %v706, 1.442695
      %v724 = vpow.pop %v723
      %v725 = vmul.f32 %v707, 1.442695
      %v726 = vpow.pop %v725
      %v727 = vmul.f32 %v708, 1.442695
      %v728 = vpow.pop %v727
      %v729 = vmul.f32 %v709, 1.442695
      %v730 = vpow.pop %v729
      %v731 = vmul.f32 %v710, 1.442695
      %v732 = vpow.pop %v731
      %v733 = vmul.f32 %v711, 1.442695
      %v734 = vpow.pop %v733
      %v735 = vmul.f32 %v712, 1.442695
      %v736 = vpow.pop %v735
      %v737 = vmul.f32 %v713, 1.442695
      %v738 = vpow.pop %v737
      %v739 = vmul.f32 %v714, 1.442695
      %v740 = vpow.pop %v739
      %v741 = vmul.f32 %v715, 1.442695
      %v742 = vpow.pop %v741
      %v743 = vmul.f32 %v716, 1.442695
      %v744 = vpow.pop %v743
      %v745 = vmul.f32 %v717, 1.442695
      %v746 = vpow.pop %v745
      %v747 = vmul.f32 %v718, 1.442695
      %v748 = vpow.pop %v747
      %v749 = vmul.f32 %v719, 1.442695
      %v750 = vpow.pop %v749
      %v751 = vmul.f32 %v720, 1.442695
      %v752 = vpow.pop %v751
      %v753 = vsel %vm561, %v722, 0.0
      %v754 = vsel %vm562, %v724, 0.0
      %v755 = vsel %vm563, %v726, 0.0
      %v756 = vsel %vm564, %v728, 0.0
      %v757 = vsel %vm565, %v730, 0.0
      %v758 = vsel %vm566, %v732, 0.0
      %v759 = vsel %vm567, %v734, 0.0
      %v760 = vsel %vm568, %v736, 0.0
      %v761 = vsel %vm569, %v738, 0.0
      %v762 = vsel %vm570, %v740, 0.0
      %v763 = vsel %vm571, %v742, 0.0
      %v764 = vsel %vm572, %v744, 0.0
      %v765 = vsel %vm573, %v746, 0.0
      %v766 = vsel %vm574, %v748, 0.0
      %v767 = vsel %vm575, %v750, 0.0
      %v768 = vsel %vm576, %v752, 0.0
      %vm769 = vcmask 7168
      %770 = vst.msk [vmem:[%s304] sm:$0xff] %vm769, %v683
      %771 = vst.msk [vmem:[%s304 + $0x8] sm:$0xff] %vm769, %v686
      %772 = vst.msk [vmem:[%s304 + $0x10] sm:$0xff] %vm769, %v689
      %773 = vst.msk [vmem:[%s304 + $0x18] sm:$0xff] %vm769, %v692
      %774 = vst.msk [vmem:[%s304 + $0x20] sm:$0xff] %vm769, %v695
      %775 = vst.msk [vmem:[%s304 + $0x28] sm:$0xff] %vm769, %v698
      %776 = vst.msk [vmem:[%s304 + $0x30] sm:$0xff] %vm769, %v701
      %777 = vst.msk [vmem:[%s304 + $0x38] sm:$0xff] %vm769, %v704
      %v778 = vadd.f32 %v753, %v754
      %779 = vadd.xlane.f32.xlu0 %v778
      %v780 = vpop.xlane.xlu0 %779
      %v781 = vadd.f32 %v755, %v756
      %782 = vadd.xlane.f32.xlu0 %v781
      %v783 = vpop.xlane.xlu0 %782
      %v784 = vadd.f32 %v757, %v758
      %785 = vadd.xlane.f32.xlu0 %v784
      %v786 = vpop.xlane.xlu0 %785
      %v787 = vadd.f32 %v759, %v760
      %788 = vadd.xlane.f32.xlu0 %v787
      %v789 = vpop.xlane.xlu0 %788
      %v790 = vadd.f32 %v761, %v762
      %791 = vadd.xlane.f32.xlu0 %v790
      %v792 = vpop.xlane.xlu0 %791
      %v793 = vadd.f32 %v763, %v764
      %794 = vadd.xlane.f32.xlu0 %v793
      %v795 = vpop.xlane.xlu0 %794
      %v796 = vadd.f32 %v765, %v766
      %797 = vadd.xlane.f32.xlu0 %v796
      %v798 = vpop.xlane.xlu0 %797
      %v799 = vadd.f32 %v767, %v768
      %800 = vadd.xlane.f32.xlu0 %v799
      %v801 = vpop.xlane.xlu0 %800
      %vm802 = vcmask 15368
      %803 = vst.msk [vmem:[%s304] sm:$0xff] %vm802, %v780
      %804 = vst.msk [vmem:[%s304 + $0x8] sm:$0xff] %vm802, %v783
      %805 = vst.msk [vmem:[%s304 + $0x10] sm:$0xff] %vm802, %v786
      %806 = vst.msk [vmem:[%s304 + $0x18] sm:$0xff] %vm802, %v789
      %807 = vst.msk [vmem:[%s304 + $0x20] sm:$0xff] %vm802, %v792
      %808 = vst.msk [vmem:[%s304 + $0x28] sm:$0xff] %vm802, %v795
      %809 = vst.msk [vmem:[%s304 + $0x30] sm:$0xff] %vm802, %v798
      %810 = vst.msk [vmem:[%s304 + $0x38] sm:$0xff] %vm802, %v801
      %v811 = vmul.f32 %v753, %v617
      %v812 = vmul.f32 %v754, %v618
      %v813 = vmul.f32 %v755, %v619
      %v814 = vmul.f32 %v756, %v620
      %v815 = vmul.f32 %v757, %v621
      %v816 = vmul.f32 %v758, %v622
      %v817 = vmul.f32 %v759, %v623
      %v818 = vmul.f32 %v760, %v624
      %v819 = vmul.f32 %v761, %v625
      %v820 = vmul.f32 %v762, %v626
      %v821 = vmul.f32 %v763, %v627
      %v822 = vmul.f32 %v764, %v628
      %v823 = vmul.f32 %v765, %v629
      %v824 = vmul.f32 %v766, %v630
      %v825 = vmul.f32 %v767, %v631
      %v826 = vmul.f32 %v768, %v632
      %v827 = vadd.f32 %v811, %v812
      %828 = vadd.xlane.f32.xlu0 %v827
      %v829 = vpop.xlane.xlu0 %828
      %v830 = vadd.f32 %v813, %v814
      %831 = vadd.xlane.f32.xlu0 %v830
      %v832 = vpop.xlane.xlu0 %831
      %v833 = vadd.f32 %v815, %v816
      %834 = vadd.xlane.f32.xlu0 %v833
      %v835 = vpop.xlane.xlu0 %834
      %v836 = vadd.f32 %v817, %v818
      %837 = vadd.xlane.f32.xlu0 %v836
      %v838 = vpop.xlane.xlu0 %837
      %v839 = vadd.f32 %v819, %v820
      %840 = vadd.xlane.f32.xlu0 %v839
      %v841 = vpop.xlane.xlu0 %840
      %v842 = vadd.f32 %v821, %v822
      %843 = vadd.xlane.f32.xlu0 %v842
      %v844 = vpop.xlane.xlu0 %843
      %v845 = vadd.f32 %v823, %v824
      %846 = vadd.xlane.f32.xlu0 %v845
      %v847 = vpop.xlane.xlu0 %846
      %v848 = vadd.f32 %v825, %v826
      %849 = vadd.xlane.f32.xlu0 %v848
      %v850 = vpop.xlane.xlu0 %849
      %vm851 = vcmask 23568
      %852 = vst.msk [vmem:[%s304] sm:$0xff] %vm851, %v829
      %853 = vst.msk [vmem:[%s304 + $0x8] sm:$0xff] %vm851, %v832
      %854 = vst.msk [vmem:[%s304 + $0x10] sm:$0xff] %vm851, %v835
      %855 = vst.msk [vmem:[%s304 + $0x18] sm:$0xff] %vm851, %v838
      %856 = vst.msk [vmem:[%s304 + $0x20] sm:$0xff] %vm851, %v841
      %857 = vst.msk [vmem:[%s304 + $0x28] sm:$0xff] %vm851, %v844
      %858 = vst.msk [vmem:[%s304 + $0x30] sm:$0xff] %vm851, %v847
      %859 = vst.msk [vmem:[%s304 + $0x38] sm:$0xff] %vm851, %v850
      %v861 = vlaneseq
      %v862 = vshrl.u32 %v861, 7
      %v863 = vsub.s32 0, %v862
      %v864 = vrot.slane %v536, %v863
      %v865 = vlaneseq
      %v866 = vshrl.u32 %v865, 7
      %v867 = vsub.s32 1, %v866
      %v868 = vrot.slane %v536, %v867
      %v871 = vsub.f32 %v488, %v864
      %v872 = vsub.f32 %v490, %v868
      %v873 = vsub.f32 %v492, %v864
      %v874 = vsub.f32 %v494, %v868
      %v875 = vsub.f32 %v498, %v864
      %v876 = vsub.f32 %v500, %v868
      %v877 = vsub.f32 %v502, %v864
      %v878 = vsub.f32 %v504, %v868
      %v879 = vsub.f32 %v508, %v864
      %v880 = vsub.f32 %v510, %v868
      %v881 = vsub.f32 %v512, %v864
      %v882 = vsub.f32 %v514, %v868
      %v883 = vsub.f32 %v518, %v864
      %v884 = vsub.f32 %v520, %v868
      %v885 = vsub.f32 %v522, %v864
      %v886 = vsub.f32 %v524, %v868
      %v888 = vlaneseq
      %v889 = vshrl.u32 %v888, 7
      %v890 = vsub.s32 0, %v889
      %v891 = vrot.slane %v534, %v890
      %v892 = vlaneseq
      %v893 = vshrl.u32 %v892, 7
      %v894 = vsub.s32 1, %v893
      %v895 = vrot.slane %v534, %v894
      %v898 = vmul.f32 %v871, %v891
      %v899 = vmul.f32 %v872, %v895
      %v900 = vmul.f32 %v873, %v891
      %v901 = vmul.f32 %v874, %v895
      %v902 = vmul.f32 %v875, %v891
      %v903 = vmul.f32 %v876, %v895
      %v904 = vmul.f32 %v877, %v891
      %v905 = vmul.f32 %v878, %v895
      %v906 = vmul.f32 %v879, %v891
      %v907 = vmul.f32 %v880, %v895
      %v908 = vmul.f32 %v881, %v891
      %v909 = vmul.f32 %v882, %v895
      %v910 = vmul.f32 %v883, %v891
      %v911 = vmul.f32 %v884, %v895
      %v912 = vmul.f32 %v885, %v891
      %v913 = vmul.f32 %v886, %v895
      %v914 = vld [vmem:[#allocation2] sm:$0x3]
      %v915 = vmax.f32 %v898, %v902
      %v916 = vmax.f32 %v900, %v904
      %v917 = vmax.f32 %v915, %v906
      %v918 = vmax.f32 %v916, %v908
      %v919 = vmax.f32 %v917, %v910
      %v920 = vmax.f32 %v918, %v912
      %v921 = vmax.f32 %v919, %v920
      %v922 = vrot.slane %v921, 4
      %v923 = vmax.f32 %v921, %v922
      %v924 = vrot.slane %v923, 2
      %v925 = vmax.f32 %v923, %v924
      %v926 = vrot.slane %v925, 1
      %v927 = vmax.f32 %v925, %v926
      %v928 = vmax.f32 %v899, %v903
      %v929 = vmax.f32 %v901, %v905
      %v930 = vmax.f32 %v928, %v907
      %v931 = vmax.f32 %v929, %v909
      %v932 = vmax.f32 %v930, %v911
      %v933 = vmax.f32 %v931, %v913
      %v934 = vmax.f32 %v932, %v933
      %v935 = vrot.slane %v934, 4
      %v936 = vmax.f32 %v934, %v935
      %v937 = vrot.slane %v936, 2
      %v938 = vmax.f32 %v936, %v937
      %v939 = vrot.slane %v938, 1
      %v940 = vmax.f32 %v938, %v939
      %v942 = vlaneseq
      %v943 = vshrl.u32 %v942, 7
      %v944 = vsub.s32 0, %v943
      %v945 = vrot.slane %v914, %v944
      %v946 = vlaneseq
      %v947 = vshrl.u32 %v946, 7
      %v948 = vsub.s32 1, %v947
      %v949 = vrot.slane %v914, %v948
      %v952 = vmax.f32 %v927, %v945
      %v953 = vmax.f32 %v940, %v949
      %v956 = vcombine.low %v952, %v953
      %v958 = vunpack.c.l.s4 1966171168
      %v959 = vunpack.c.0.s8 %v958
      %v960 = vlaneseq
      %v961 = vshrl.u32 %v960, 7
      %v962 = vsub.s32 %v959, %v961
      %v963 = vrot.slane %v956, %v962
      %v965 = vunpack.c.l.s4 1966171168
      %v966 = vunpack.c.0.s8 %v965
      %v967 = vlaneseq
      %v968 = vshrl.u32 %v967, 7
      %v969 = vsub.s32 %v966, %v968
      %v970 = vrot.slane %v963, %v969
      %v972 = vsub.f32 %v914, %v970
      %v973 = vmul.f32 %v972, 1.442695
      %v974 = vpow.pop %v973
      %v975 = vlaneseq
      %v976 = vshrl.u32 %v975, 7
      %v977 = vsub.s32 0, %v976
      %v978 = vrot.slane %v952, %v977
      %v979 = vlaneseq
      %v980 = vshrl.u32 %v979, 7
      %v981 = vsub.s32 0, %v980
      %v982 = vrot.slane %v953, %v981
      %v983 = vsub.f32 %v898, %v978
      %v984 = vsub.f32 %v899, %v982
      %v985 = vsub.f32 %v900, %v978
      %v986 = vsub.f32 %v901, %v982
      %v987 = vsub.f32 %v902, %v978
      %v988 = vsub.f32 %v903, %v982
      %v989 = vsub.f32 %v904, %v978
      %v990 = vsub.f32 %v905, %v982
      %v991 = vsub.f32 %v906, %v978
      %v992 = vsub.f32 %v907, %v982
      %v993 = vsub.f32 %v908, %v978
      %v994 = vsub.f32 %v909, %v982
      %v995 = vsub.f32 %v910, %v978
      %v996 = vsub.f32 %v911, %v982
      %v997 = vsub.f32 %v912, %v978
      %v998 = vsub.f32 %v913, %v982
      %v999 = vmul.f32 %v983, 1.442695
      %v1000 = vpow.pop %v999
      %v1001 = vmul.f32 %v984, 1.442695
      %v1002 = vpow.pop %v1001
      %v1003 = vmul.f32 %v985, 1.442695
      %v1004 = vpow.pop %v1003
      %v1005 = vmul.f32 %v986, 1.442695
      %v1006 = vpow.pop %v1005
      %v1007 = vmul.f32 %v987, 1.442695
      %v1008 = vpow.pop %v1007
      %v1009 = vmul.f32 %v988, 1.442695
      %v1010 = vpow.pop %v1009
      %v1011 = vmul.f32 %v989, 1.442695
      %v1012 = vpow.pop %v1011
      %v1013 = vmul.f32 %v990, 1.442695
      %v1014 = vpow.pop %v1013
      %v1015 = vmul.f32 %v991, 1.442695
      %v1016 = vpow.pop %v1015
      %v1017 = vmul.f32 %v992, 1.442695
      %v1018 = vpow.pop %v1017
      %v1019 = vmul.f32 %v993, 1.442695
      %v1020 = vpow.pop %v1019
      %v1021 = vmul.f32 %v994, 1.442695
      %v1022 = vpow.pop %v1021
      %v1023 = vmul.f32 %v995, 1.442695
      %v1024 = vpow.pop %v1023
      %v1025 = vmul.f32 %v996, 1.442695
      %v1026 = vpow.pop %v1025
      %v1027 = vmul.f32 %v997, 1.442695
      %v1028 = vpow.pop %v1027
      %v1029 = vmul.f32 %v998, 1.442695
      %v1030 = vpow.pop %v1029
      %v1031 = vsel %vm561, %v1000, 0.0
      %v1032 = vsel %vm562, %v1002, 0.0
      %v1033 = vsel %vm563, %v1004, 0.0
      %v1034 = vsel %vm564, %v1006, 0.0
      %v1035 = vsel %vm565, %v1008, 0.0
      %v1036 = vsel %vm566, %v1010, 0.0
      %v1037 = vsel %vm567, %v1012, 0.0
      %v1038 = vsel %vm568, %v1014, 0.0
      %v1039 = vsel %vm569, %v1016, 0.0
      %v1040 = vsel %vm570, %v1018, 0.0
      %v1041 = vsel %vm571, %v1020, 0.0
      %v1042 = vsel %vm572, %v1022, 0.0
      %v1043 = vsel %vm573, %v1024, 0.0
      %v1044 = vsel %vm574, %v1026, 0.0
      %v1045 = vsel %vm575, %v1028, 0.0
      %v1046 = vsel %vm576, %v1030, 0.0
      %v1047 = vld [vmem:[#allocation3] sm:$0x3]
      %v1048 = vmul.f32 %v1047, %v974
      %v1049 = vadd.f32 %v1031, %v1033
      %v1050 = vadd.f32 %v1049, %v1035
      %v1051 = vadd.f32 %v1050, %v1037
      %v1052 = vadd.f32 %v1051, %v1039
      %v1053 = vadd.f32 %v1052, %v1041
      %v1054 = vadd.f32 %v1053, %v1043
      %v1055 = vadd.f32 %v1054, %v1045
      %v1056 = vrot.slane %v1055, 4
      %v1057 = vadd.f32 %v1055, %v1056
      %v1058 = vrot.slane %v1057, 2
      %v1059 = vadd.f32 %v1057, %v1058
      %v1060 = vrot.slane %v1059, 1
      %v1061 = vadd.f32 %v1059, %v1060
      %v1062 = vadd.f32 %v1032, %v1034
      %v1063 = vadd.f32 %v1062, %v1036
      %v1064 = vadd.f32 %v1063, %v1038
      %v1065 = vadd.f32 %v1064, %v1040
      %v1066 = vadd.f32 %v1065, %v1042
      %v1067 = vadd.f32 %v1066, %v1044
      %v1068 = vadd.f32 %v1067, %v1046
      %v1069 = vrot.slane %v1068, 4
      %v1070 = vadd.f32 %v1068, %v1069
      %v1071 = vrot.slane %v1070, 2
      %v1072 = vadd.f32 %v1070, %v1071
      %v1073 = vrot.slane %v1072, 1
      %v1074 = vadd.f32 %v1072, %v1073
      %v1077 = vcombine.low %v1061, %v1074
      %v1079 = vunpack.c.l.s4 1966171168
      %v1080 = vunpack.c.0.s8 %v1079
      %v1081 = vlaneseq
      %v1082 = vshrl.u32 %v1081, 7
      %v1083 = vsub.s32 %v1080, %v1082
      %v1084 = vrot.slane %v1077, %v1083
      %v1086 = vunpack.c.l.s4 1966171168
      %v1087 = vunpack.c.0.s8 %v1086
      %v1088 = vlaneseq
      %v1089 = vshrl.u32 %v1088, 7
      %v1090 = vsub.s32 %v1087, %v1089
      %v1091 = vrot.slane %v1084, %v1090
      %v1093 = vadd.f32 %v1048, %v1091
      %v1094 = vlaneseq
      %vm1095 = vcmp.ge.s32.totalorder %v1094, 0
      %vm1096 = vcmp.lt.s32.totalorder %v1094, 256
      %vm1097 = vmand %vm1095, %vm1096
      %1098 = vst.msk [vmem:[#allocation3] sm:$0x3] %vm1097, %v1093
      %v1099 = vld [vmem:[#allocation4] sm:$0x3]
      %v1100 = vmul.f32 %v1099, %v974
      %v1101 = vmul.f32 %v1031, %v871
      %v1102 = vmul.f32 %v1032, %v872
      %v1103 = vmul.f32 %v1033, %v873
      %v1104 = vmul.f32 %v1034, %v874
      %v1105 = vmul.f32 %v1035, %v875
      %v1106 = vmul.f32 %v1036, %v876
      %v1107 = vmul.f32 %v1037, %v877
      %v1108 = vmul.f32 %v1038, %v878
      %v1109 = vmul.f32 %v1039, %v879
      %v1110 = vmul.f32 %v1040, %v880
      %v1111 = vmul.f32 %v1041, %v881
      %v1112 = vmul.f32 %v1042, %v882
      %v1113 = vmul.f32 %v1043, %v883
      %v1114 = vmul.f32 %v1044, %v884
      %v1115 = vmul.f32 %v1045, %v885
      %v1116 = vmul.f32 %v1046, %v886
      %v1117 = vadd.f32 %v1101, %v1103
      %v1118 = vadd.f32 %v1117, %v1105
      %v1119 = vadd.f32 %v1118, %v1107
      %v1120 = vadd.f32 %v1119, %v1109
      %v1121 = vadd.f32 %v1120, %v1111
      %v1122 = vadd.f32 %v1121, %v1113
      %v1123 = vadd.f32 %v1122, %v1115
      %v1124 = vrot.slane %v1123, 4
      %v1125 = vadd.f32 %v1123, %v1124
      %v1126 = vrot.slane %v1125, 2
      %v1127 = vadd.f32 %v1125, %v1126
      %v1128 = vrot.slane %v1127, 1
      %v1129 = vadd.f32 %v1127, %v1128
      %v1130 = vadd.f32 %v1102, %v1104
      %v1131 = vadd.f32 %v1130, %v1106
      %v1132 = vadd.f32 %v1131, %v1108
      %v1133 = vadd.f32 %v1132, %v1110
      %v1134 = vadd.f32 %v1133, %v1112
      %v1135 = vadd.f32 %v1134, %v1114
      %v1136 = vadd.f32 %v1135, %v1116
      %v1137 = vrot.slane %v1136, 4
      %v1138 = vadd.f32 %v1136, %v1137
      %v1139 = vrot.slane %v1138, 2
      %v1140 = vadd.f32 %v1138, %v1139
      %v1141 = vrot.slane %v1140, 1
      %v1142 = vadd.f32 %v1140, %v1141
      %v1145 = vcombine.low %v1129, %v1142
      %v1147 = vunpack.c.l.s4 1966171168
      %v1148 = vunpack.c.0.s8 %v1147
      %v1149 = vlaneseq
      %v1150 = vshrl.u32 %v1149, 7
      %v1151 = vsub.s32 %v1148, %v1150
      %v1152 = vrot.slane %v1145, %v1151
      %v1154 = vunpack.c.l.s4 1966171168
      %v1155 = vunpack.c.0.s8 %v1154
      %v1156 = vlaneseq
      %v1157 = vshrl.u32 %v1156, 7
      %v1158 = vsub.s32 %v1155, %v1157
      %v1159 = vrot.slane %v1152, %v1158
      %v1161 = vadd.f32 %v1100, %v1159
      %1162 = vst.msk [vmem:[#allocation4] sm:$0x3] %vm1097, %v1161
      %1163 = vst.msk [vmem:[#allocation2] sm:$0x3] %vm1097, %v970
      %p1164 = scmp.eq.s32.totalorder %s22, 1
      // Predicated region
      $region41: #{tpu_custom_call.1} parent=35 // pred_check
        %p1165 = pneg %p1164
      $region42: #{tpu_custom_call.1} parent=35 // pred_check_branch
        %1167 = sbr.rel (%p1165) target = $region44
      $region43: #{tpu_custom_call.1} parent=35 // pred_region
        %v1168 = vld [vmem:[#allocation2] sm:$0x3]
        %1169 = vst.msk [vmem:[%s312] ss:$4 sm:$0x3] %vm1097, %v1168
        %v1170 = vld [vmem:[#allocation3] sm:$0x3]
        %s1171 = scalar_lea.vmem %s312, 1
        %1172 = vst.msk [vmem:[%s1171] ss:$4 sm:$0x3] %vm1097, %v1170
        %v1173 = vld [vmem:[#allocation4] sm:$0x3]
        %s1174 = scalar_lea.vmem %s312, 2
        %1175 = vst.msk [vmem:[%s1174] ss:$4 sm:$0x3] %vm1097, %v1173
      $region44: #{tpu_custom_call.1} parent=35 // pred_fallthru
        _
      %s1176 = smul.u32 %s21, 2
      %s1177 = sadd.s32 %s1176, %s22
      %s1178 = smul.u32 8, %s1177
      %p1179 = scmp.lt.s32.totalorder %s1178, 31
      %s1180 = scalar_select %p1179, %s1178, 31
      %s1181 = smul.addr %s1180, 8
      %s1182 = scalar_lea.vmem %s4, %s1181
      %p1183 = scmp.lt.s32.totalorder %s21, 1
      %s1184 = scalar_select %p1183, %s21, 1
      %s1185 = smul.addr %s1184, 2
      %s1186 = smul.addr %s1185, 4
      %s1187 = scalar_lea.vmem %s5, %s1186
      // Predicated region
      $region45: #{tpu_custom_call.1} parent=35 // pred_check
        %p1188 = pneg %p153
      $region46: #{tpu_custom_call.1} parent=35 // pred_check_branch
        %1190 = sbr.rel (%p1188) target = $region48
      $region47: #{tpu_custom_call.1} parent=35 // pred_region
        %s1191 = smul.u32 %s21, 2
        %s1192 = sadd.s32 %s1191, %s22
        %s1193 = smul.u32 8, %s1192
      $region48: #{tpu_custom_call.1} parent=35 // pred_fallthru
        _
      // Predicated region
      $region49: #{tpu_custom_call.1} parent=35 // pred_check
        %p1194 = pneg %p179
      $region50: #{tpu_custom_call.1} parent=35 // pred_check_branch
        %1196 = sbr.rel (%p1194) target = $region52
      $region51: #{tpu_custom_call.1} parent=35 // pred_region
        _
      $region52: #{tpu_custom_call.1} parent=35 // pred_fallthru
        _
    $region36: #{tpu_custom_call.1} parent=5 // pred_fallthru
      _
    %p1197 = scmp.le.s32.totalorder 2, %s12
    // Predicated region
    $region53: #{tpu_custom_call.1} parent=5 // pred_check
      %p1198 = pneg %p1197
    $region54: #{tpu_custom_call.1} parent=5 // pred_check_branch
      %1200 = sbr.rel (%p1198) target = $region56
    $region55: #{tpu_custom_call.1} parent=5 // pred_region
      %s1201 = ssub.s32 %s12, 2
      // Predicated region
      $region57: #{tpu_custom_call.1} parent=55 // pred_check
        %p1202 = pneg %p159
      $region58: #{tpu_custom_call.1} parent=55 // pred_check_branch
        %1204 = sbr.rel (%p1202) target = $region60
      $region59: #{tpu_custom_call.1} parent=55 // pred_region
        %s1205 = smul.u32 %s23, 2
        %s1206 = sadd.s32 %s1205, %s24
        %s1207 = smul.u32 8, %s1206
        %p1208 = scmp.lt.s32.totalorder %s1207, 31
        %s1209 = scalar_select %p1208, %s1207, 31
        %s1210 = smul.addr %s1209, 8
        %s1211 = scalar_lea.vmem %s4, %s1210
      $region60: #{tpu_custom_call.1} parent=55 // pred_fallthru
        _
      // Predicated region
      $region61: #{tpu_custom_call.1} parent=55 // pred_check
        %p1212 = pneg %p185
      $region62: #{tpu_custom_call.1} parent=55 // pred_check_branch
        %1214 = sbr.rel (%p1212) target = $region64
      $region63: #{tpu_custom_call.1} parent=55 // pred_region
        %p1215 = scmp.lt.s32.totalorder %s23, 1
        %s1216 = scalar_select %p1215, %s23, 1
        %s1217 = smul.addr %s1216, 2
        %s1218 = smul.addr %s1217, 4
        %s1219 = scalar_lea.vmem %s5, %s1218
      $region64: #{tpu_custom_call.1} parent=55 // pred_fallthru
        _
    $region56: #{tpu_custom_call.1} parent=5 // pred_fallthru
      _
  $region6: #{tpu_custom_call.1} parent=0 // loop_footer
    %s16 = sadd.s32 1, %s12
  $region7: #{tpu_custom_call.1} parent=0 // loop_footer_branch
    %11 = sbr.rel target = $region3
  $region8: #{tpu_custom_call.1} parent=0 // loop_exit
    _

</llo_original>
